<compile_context>
chip_gen: v6e
topology: v6e:2x2x1
jax: 0.10.0
libtpu: 0.0.40
codegen_flags: <defaults>
</compile_context>

<pallas_src>
import functools
import math

import jax
import jax.numpy as jnp
from jax.experimental import pallas as pl
from jax.experimental.pallas import tpu as pltpu


def _round_up(x: int, m: int) -> int:
    return ((x + m - 1) // m) * m


def _linear_single_k_kernel(x_ref, w_ref, b_ref, o_ref, *, apply_relu: bool):
    """Whole-K linear tile: o = (relu)(x @ w + b). grid = (M tiles, N tiles)."""
    out = jnp.dot(x_ref[...], w_ref[...], preferred_element_type=jnp.float32)
    out = out + b_ref[...]
    if apply_relu:
        out = jnp.maximum(out, 0.0)
    o_ref[...] = out.astype(o_ref.dtype)


def _linear_tiled_k_kernel(x_ref, w_ref, b_ref, o_ref, acc_ref, *, apply_relu: bool):
    """K-tiled linear: grid = (M tiles, N tiles, K tiles); K last, 'arbitrary'."""
    k = pl.program_id(2)

    @pl.when(k == 0)
    def _():
        # Fold the bias add into the accumulator init (no epilogue add).
        acc_ref[...] = jnp.broadcast_to(
            b_ref[...].astype(jnp.float32), acc_ref.shape
        )

    acc_ref[...] += jnp.dot(
        x_ref[...], w_ref[...], preferred_element_type=jnp.float32
    )

    @pl.when(k == pl.num_programs(2) - 1)
    def _():
        out = acc_ref[...]
        if apply_relu:
            out = jnp.maximum(out, 0.0)
        o_ref[...] = out.astype(o_ref.dtype)


def linear_pallas(x, w_t, b2d, *, apply_relu: bool,
                  tm_max: int = 256, tn_max: int = 256,
                  vmem_budget_bytes: int = 24 * 1024 * 1024):
    """(ReLU)(x @ w_t + b) with f32 MXU accumulation.

    x:   (M, K) float32 activations
    w_t: (K, N) float32 weight, already pre-transposed at init time
    b2d: (1, N) float32 bias, already reshaped at init time
    """
    M, K = x.shape
    Kw, N = w_t.shape
    assert K == Kw, (K, Kw)
    assert b2d.shape == (1, N), b2d.shape

    itemsize = jnp.dtype(x.dtype).itemsize
    sub = 8 * (4 // itemsize)                    # 8 for f32, 16 for bf16

    # Tile sizes.  Partial M / N edge blocks are masked by Pallas; only a partial
    # K block would pollute the reduction, which we avoid below.
    tm = min(_round_up(M, sub), tm_max)
    tn = N if N <= tn_max else tn_max            # tn_max is a multiple of 128

    n_m = pl.cdiv(M, tm)
    n_n = pl.cdiv(N, tn)

    cost = pl.CostEstimate(
        flops=2 * M * N * K,
        transcendentals=0,
        bytes_accessed=(M * K + K * N + N + M * N) * itemsize,
    )

    # How much of K fits as one tile under the VMEM budget (double-buffered x + w).
    per_k_bytes = 2 * (tm + tn) * itemsize
    allowed_k = max(128, vmem_budget_bytes // per_k_bytes)

    if K <= allowed_k:
        # Single K step: no accumulator scratch, no init/epilogue branches.
        kernel = functools.partial(_linear_single_k_kernel, apply_relu=apply_relu)
        return pl.pallas_call(
            kernel,
            out_shape=jax.ShapeDtypeStruct((M, N), jnp.float32),
            grid_spec=pltpu.PrefetchScalarGridSpec(
                num_scalar_prefetch=0,
                grid=(n_m, n_n),
                in_specs=[
                    pl.BlockSpec((tm, K), lambda i, j: (i, 0)),   # x tile (full K)
                    pl.BlockSpec((K, tn), lambda i, j: (0, j)),   # weight tile
                    pl.BlockSpec((1, tn), lambda i, j: (0, j)),   # bias tile
                ],
                out_specs=pl.BlockSpec((tm, tn), lambda i, j: (i, j)),
            ),
            compiler_params=pltpu.CompilerParams(
                dimension_semantics=("parallel", "parallel"),
            ),
            cost_estimate=cost,
        )(x, w_t, b2d)

    # General large-K path: tile K (multiple of 128), pad K with zeros so no
    # garbage enters the reduction.
    tk = max(128, min((allowed_k // 128) * 128, 2048))
    k_pad = _round_up(K, tk)
    if k_pad != K:
        x = jnp.pad(x, ((0, 0), (0, k_pad - K)))
        w_t = jnp.pad(w_t, ((0, k_pad - K), (0, 0)))

    kernel = functools.partial(_linear_tiled_k_kernel, apply_relu=apply_relu)
    return pl.pallas_call(
        kernel,
        out_shape=jax.ShapeDtypeStruct((M, N), jnp.float32),
        grid_spec=pltpu.PrefetchScalarGridSpec(
            num_scalar_prefetch=0,
            grid=(n_m, n_n, k_pad // tk),
            in_specs=[
                pl.BlockSpec((tm, tk), lambda i, j, k: (i, k)),   # x tile
                pl.BlockSpec((tk, tn), lambda i, j, k: (k, j)),   # weight tile
                pl.BlockSpec((1, tn), lambda i, j, k: (0, j)),    # bias tile
            ],
            out_specs=pl.BlockSpec((tm, tn), lambda i, j, k: (i, j)),
            scratch_shapes=[pltpu.VMEM((tm, tn), jnp.float32)],   # f32 accumulator
        ),
        compiler_params=pltpu.CompilerParams(
            dimension_semantics=("parallel", "parallel", "arbitrary"),
        ),
        cost_estimate=cost,
    )(x, w_t, b2d)


def init_mlp_params(key, layer_sizes=(4096, 4)):
    """torch.nn.Linear-style init.

    Parameters are stored once, in their final kernel layout:
      weight pre-transposed to (in_features, out_features), bias as (1, out).
    No per-call transpose / cast / pad remains in the forward path.
    """
    params = []
    for i in range(1, len(layer_sizes)):
        fan_in, fan_out = layer_sizes[i - 1], layer_sizes[i]
        key, kw, kb = jax.random.split(key, 3)
        bound = 1.0 / math.sqrt(fan_in)
        w_t = jax.random.uniform(kw, (fan_in, fan_out), jnp.float32, -bound, bound)
        b = jax.random.uniform(kb, (1, fan_out), jnp.float32, -bound, bound)
        params.append((w_t, b))
    return params


def mlp_forward(x, params):
    """Equivalent to MLP.forward(x, training=False)."""
    for w_t, b in params[:-1]:
        x = linear_pallas(x, w_t, b, apply_relu=True)
    w_t, b = params[-1]
    return linear_pallas(x, w_t, b, apply_relu=False)


def _ref_forward(x, params):
    """Pure-JAX f32 reference (same math as the PyTorch module in eval mode)."""
    h = x
    n = len(params)
    for idx, (w_t, b) in enumerate(params):
        h = jnp.dot(h, w_t, preferred_element_type=jnp.float32) + b
        if idx < n - 1:
            h = jnp.maximum(h, 0.0)
    return h


if __name__ == "__main__":
    key = jax.random.PRNGKey(0)
    layer_sizes = (4096, 4)            # module default: single Linear(4096, 4)
    batch = 8

    kx, kp = jax.random.split(key)
    x = jax.random.normal(kx, (batch, layer_sizes[0]), jnp.float32)
    params = init_mlp_params(kp, layer_sizes)

    logits = mlp_forward(x, params)
    logits = jax.block_until_ready(logits)

    ref = _ref_forward(x, params)

    assert logits.shape == (batch, layer_sizes[-1]), logits.shape
    assert jnp.allclose(logits, ref, atol=1e-2, rtol=1e-2), (
        float(jnp.max(jnp.abs(logits - ref)))
    )
    print("KERNEL_OK")
</pallas_src>

<mosaic_0001>
module attributes {stable_mosaic.version = 11 : i64} {
  func.func @_linear_single_k_kernel(%arg0: i32, %arg1: i32, %arg2: memref<8x4096xf32, #tpu.memory_space<vmem>>, %arg3: memref<4096x4xf32, #tpu.memory_space<vmem>>, %arg4: memref<1x4xf32, #tpu.memory_space<vmem>>, %arg5: memref<8x4xf32, #tpu.memory_space<vmem>>) attributes {dimension_semantics = [#tpu.dimension_semantics<parallel>, #tpu.dimension_semantics<parallel>], iteration_bounds = array<i64: 1, 1>, scalar_prefetch = 0 : i64, scratch_operands = 0 : i64, tpu.core_type = #tpu.core_type<tc>, window_params = [{transform_indices = @transform_0, window_bounds = array<i64: 8, 4096>}, {transform_indices = @transform_1, window_bounds = array<i64: 4096, 4>}, {transform_indices = @transform_2, window_bounds = array<i64: 1, 4>}, {transform_indices = @transform_3, window_bounds = array<i64: 8, 4>}]} {
    %c0 = arith.constant 0 : index
    %c0_0 = arith.constant 0 : index
    %0 = vector.load %arg2[%c0, %c0_0] : memref<8x4096xf32, #tpu.memory_space<vmem>>, vector<8x4096xf32>
    %c0_1 = arith.constant 0 : index
    %c0_2 = arith.constant 0 : index
    %1 = vector.load %arg3[%c0_1, %c0_2] : memref<4096x4xf32, #tpu.memory_space<vmem>>, vector<4096x4xf32>
    %cst = arith.constant dense<0.000000e+00> : vector<8x4xf32>
    %2 = tpu.matmul %0, %1, %cst {dimension_numbers = #tpu.dot_dimension_numbers<[1], [0], [0], [1], [0, 0, 1, 1], [], []>} : vector<8x4096xf32>, vector<4096x4xf32>, vector<8x4xf32> -> vector<8x4xf32>
    %c0_3 = arith.constant 0 : index
    %c0_4 = arith.constant 0 : index
    %3 = vector.load %arg4[%c0_3, %c0_4] : memref<1x4xf32, #tpu.memory_space<vmem>>, vector<1x4xf32>
    %4 = vector.broadcast %3 : vector<1x4xf32> to vector<8x4xf32>
    %5 = arith.addf %2, %4 : vector<8x4xf32>
    %c0_5 = arith.constant 0 : index
    %c0_6 = arith.constant 0 : index
    %6 = vector.load %arg5[%c0_5, %c0_6] : memref<8x4xf32, #tpu.memory_space<vmem>>, vector<8x4xf32>
    tpu.vector_store %arg5[%c0_5, %c0_6], %5 {strides = array<i32>} : memref<8x4xf32, #tpu.memory_space<vmem>>, vector<8x4xf32>,
    return
  }
  func.func @transform_0(%arg0: i32, %arg1: i32) -> (i32, i32) {
    %c0_i32 = arith.constant 0 : i32
    %c0_i32_0 = arith.constant 0 : i32
    return %arg0, %c0_i32 : i32, i32
  }
  func.func @transform_1(%arg0: i32, %arg1: i32) -> (i32, i32) {
    %c0_i32 = arith.constant 0 : i32
    %c0_i32_0 = arith.constant 0 : i32
    return %c0_i32, %arg1 : i32, i32
  }
  func.func @transform_2(%arg0: i32, %arg1: i32) -> (i32, i32) {
    %c0_i32 = arith.constant 0 : i32
    %c0_i32_0 = arith.constant 0 : i32
    return %c0_i32, %arg1 : i32, i32
  }
  func.func @transform_3(%arg0: i32, %arg1: i32) -> (i32, i32) {
    %c0_i32 = arith.constant 0 : i32
    return %arg0, %arg1 : i32, i32
  }
}

</mosaic_0001>

<llo_original>
// kernel: tpu_custom_call.1
$region0: #{tpu_custom_call.1}
  #allocation0 [shape = 'u32[]', space=smem, size = 0x4, offset = 0x4, fixed_abs, tag = 'smem constant byte address 0x4 - core index']
  #allocation1 [shape = 'u32[144,128]{1,0:T(1,128)}', space=vmem, size = 0x12000, scoped, tag = 'internal scratch']
  %s0 = inlined_call_operand.vmem [shape: f32[8,4096], index: 0, kind: input, shape index: {}]
  %s1 = inlined_call_operand.vmem [shape: f32[4096,4], index: 1, kind: input, shape index: {}]
  %s2 = inlined_call_operand.vmem [shape: f32[1,4], index: 2, kind: input, shape index: {}]
  %s3 = inlined_call_operand.vmem [shape: f32[8,4], index: 3, kind: output, shape index: {}]
  %s4 = sld [smem:[#allocation0]]
  $region22: #{tpu_custom_call.1} parent=0
    _
  %s6 = ssub.s32 1, %s4
  %s7 = scalar_select 0, %s6, %s4
  // Predicated region
  $region2: #{tpu_custom_call.1} parent=0 // pred_check
    _
  $region3: #{tpu_custom_call.1} parent=0 // pred_check_branch
    %9 = sbr.rel (0) target = $region5
  $region4: #{tpu_custom_call.1} parent=0 // pred_region
    _
  $region5: #{tpu_custom_call.1} parent=0 // pred_fallthru
    _
  // Predicated region
  $region6: #{tpu_custom_call.1} parent=0 // pred_check
    _
  $region7: #{tpu_custom_call.1} parent=0 // pred_check_branch
    %11 = sbr.rel (0) target = $region9
  $region8: #{tpu_custom_call.1} parent=0 // pred_region
    _
  $region9: #{tpu_custom_call.1} parent=0 // pred_fallthru
    _
  // Predicated region
  $region10: #{tpu_custom_call.1} parent=0 // pred_check
    _
  $region11: #{tpu_custom_call.1} parent=0 // pred_check_branch
    %13 = sbr.rel (0) target = $region13
  $region12: #{tpu_custom_call.1} parent=0 // pred_region
    _
  $region13: #{tpu_custom_call.1} parent=0 // pred_fallthru
    _
  %v14 = vld [vmem:[%s0] sm:$0xff]
  %v15 = vld [vmem:[%s0 + $0x8] sm:$0xff]
  %v16 = vld [vmem:[%s0 + $0x10] sm:$0xff]
  %v17 = vld [vmem:[%s0 + $0x18] sm:$0xff]
  %v18 = vld [vmem:[%s0 + $0x20] sm:$0xff]
  %v19 = vld [vmem:[%s0 + $0x28] sm:$0xff]
  %v20 = vld [vmem:[%s0 + $0x30] sm:$0xff]
  %v21 = vld [vmem:[%s0 + $0x38] sm:$0xff]
  %v22 = vld [vmem:[%s0 + $0x40] sm:$0xff]
  %v23 = vld [vmem:[%s0 + $0x48] sm:$0xff]
  %v24 = vld [vmem:[%s0 + $0x50] sm:$0xff]
  %v25 = vld [vmem:[%s0 + $0x58] sm:$0xff]
  %v26 = vld [vmem:[%s0 + $0x60] sm:$0xff]
  %v27 = vld [vmem:[%s0 + $0x68] sm:$0xff]
  %v28 = vld [vmem:[%s0 + $0x70] sm:$0xff]
  %v29 = vld [vmem:[%s0 + $0x78] sm:$0xff]
  %v30 = vld [vmem:[%s0 + $0x80] sm:$0xff]
  %v31 = vld [vmem:[%s0 + $0x88] sm:$0xff]
  %v32 = vld [vmem:[%s0 + $0x90] sm:$0xff]
  %v33 = vld [vmem:[%s0 + $0x98] sm:$0xff]
  %v34 = vld [vmem:[%s0 + $0xa0] sm:$0xff]
  %v35 = vld [vmem:[%s0 + $0xa8] sm:$0xff]
  %v36 = vld [vmem:[%s0 + $0xb0] sm:$0xff]
  %v37 = vld [vmem:[%s0 + $0xb8] sm:$0xff]
  %v38 = vld [vmem:[%s0 + $0xc0] sm:$0xff]
  %v39 = vld [vmem:[%s0 + $0xc8] sm:$0xff]
  %v40 = vld [vmem:[%s0 + $0xd0] sm:$0xff]
  %v41 = vld [vmem:[%s0 + $0xd8] sm:$0xff]
  %v42 = vld [vmem:[%s0 + $0xe0] sm:$0xff]
  %v43 = vld [vmem:[%s0 + $0xe8] sm:$0xff]
  %v44 = vld [vmem:[%s0 + $0xf0] sm:$0xff]
  %v45 = vld [vmem:[%s0 + $0xf8] sm:$0xff]
  %v46 = vld [vmem:[%s1] sm:$0xff]
  %v47 = vld [vmem:[%s1 + $0x8] sm:$0xff]
  %v48 = vld [vmem:[%s1 + $0x10] sm:$0xff]
  %v49 = vld [vmem:[%s1 + $0x18] sm:$0xff]
  %v50 = vld [vmem:[%s1 + $0x20] sm:$0xff]
  %v51 = vld [vmem:[%s1 + $0x28] sm:$0xff]
  %v52 = vld [vmem:[%s1 + $0x30] sm:$0xff]
  %v53 = vld [vmem:[%s1 + $0x38] sm:$0xff]
  %v54 = vld [vmem:[%s1 + $0x40] sm:$0xff]
  %v55 = vld [vmem:[%s1 + $0x48] sm:$0xff]
  %v56 = vld [vmem:[%s1 + $0x50] sm:$0xff]
  %v57 = vld [vmem:[%s1 + $0x58] sm:$0xff]
  %v58 = vld [vmem:[%s1 + $0x60] sm:$0xff]
  %v59 = vld [vmem:[%s1 + $0x68] sm:$0xff]
  %v60 = vld [vmem:[%s1 + $0x70] sm:$0xff]
  %v61 = vld [vmem:[%s1 + $0x78] sm:$0xff]
  %v62 = vld [vmem:[%s1 + $0x80] sm:$0xff]
  %v63 = vld [vmem:[%s1 + $0x88] sm:$0xff]
  %v64 = vld [vmem:[%s1 + $0x90] sm:$0xff]
  %v65 = vld [vmem:[%s1 + $0x98] sm:$0xff]
  %v66 = vld [vmem:[%s1 + $0xa0] sm:$0xff]
  %v67 = vld [vmem:[%s1 + $0xa8] sm:$0xff]
  %v68 = vld [vmem:[%s1 + $0xb0] sm:$0xff]
  %v69 = vld [vmem:[%s1 + $0xb8] sm:$0xff]
  %v70 = vld [vmem:[%s1 + $0xc0] sm:$0xff]
  %v71 = vld [vmem:[%s1 + $0xc8] sm:$0xff]
  %v72 = vld [vmem:[%s1 + $0xd0] sm:$0xff]
  %v73 = vld [vmem:[%s1 + $0xd8] sm:$0xff]
  %v74 = vld [vmem:[%s1 + $0xe0] sm:$0xff]
  %v75 = vld [vmem:[%s1 + $0xe8] sm:$0xff]
  %v76 = vld [vmem:[%s1 + $0xf0] sm:$0xff]
  %v77 = vld [vmem:[%s1 + $0xf8] sm:$0xff]
  %v78 = vld [vmem:[%s1 + $0x100] sm:$0xff]
  %v79 = vld [vmem:[%s1 + $0x108] sm:$0xff]
  %v80 = vld [vmem:[%s1 + $0x110] sm:$0xff]
  %v81 = vld [vmem:[%s1 + $0x118] sm:$0xff]
  %v82 = vld [vmem:[%s1 + $0x120] sm:$0xff]
  %v83 = vld [vmem:[%s1 + $0x128] sm:$0xff]
  %v84 = vld [vmem:[%s1 + $0x130] sm:$0xff]
  %v85 = vld [vmem:[%s1 + $0x138] sm:$0xff]
  %v86 = vld [vmem:[%s1 + $0x140] sm:$0xff]
  %v87 = vld [vmem:[%s1 + $0x148] sm:$0xff]
  %v88 = vld [vmem:[%s1 + $0x150] sm:$0xff]
  %v89 = vld [vmem:[%s1 + $0x158] sm:$0xff]
  %v90 = vld [vmem:[%s1 + $0x160] sm:$0xff]
  %v91 = vld [vmem:[%s1 + $0x168] sm:$0xff]
  %v92 = vld [vmem:[%s1 + $0x170] sm:$0xff]
  %v93 = vld [vmem:[%s1 + $0x178] sm:$0xff]
  %v94 = vld [vmem:[%s1 + $0x180] sm:$0xff]
  %v95 = vld [vmem:[%s1 + $0x188] sm:$0xff]
  %v96 = vld [vmem:[%s1 + $0x190] sm:$0xff]
  %v97 = vld [vmem:[%s1 + $0x198] sm:$0xff]
  %v98 = vld [vmem:[%s1 + $0x1a0] sm:$0xff]
  %v99 = vld [vmem:[%s1 + $0x1a8] sm:$0xff]
  %v100 = vld [vmem:[%s1 + $0x1b0] sm:$0xff]
  %v101 = vld [vmem:[%s1 + $0x1b8] sm:$0xff]
  %v102 = vld [vmem:[%s1 + $0x1c0] sm:$0xff]
  %v103 = vld [vmem:[%s1 + $0x1c8] sm:$0xff]
  %v104 = vld [vmem:[%s1 + $0x1d0] sm:$0xff]
  %v105 = vld [vmem:[%s1 + $0x1d8] sm:$0xff]
  %v106 = vld [vmem:[%s1 + $0x1e0] sm:$0xff]
  %v107 = vld [vmem:[%s1 + $0x1e8] sm:$0xff]
  %v108 = vld [vmem:[%s1 + $0x1f0] sm:$0xff]
  %v109 = vld [vmem:[%s1 + $0x1f8] sm:$0xff]
  %v110 = vld [vmem:[%s1 + $0x200] sm:$0xff]
  %v111 = vld [vmem:[%s1 + $0x208] sm:$0xff]
  %v112 = vld [vmem:[%s1 + $0x210] sm:$0xff]
  %v113 = vld [vmem:[%s1 + $0x218] sm:$0xff]
  %v114 = vld [vmem:[%s1 + $0x220] sm:$0xff]
  %v115 = vld [vmem:[%s1 + $0x228] sm:$0xff]
  %v116 = vld [vmem:[%s1 + $0x230] sm:$0xff]
  %v117 = vld [vmem:[%s1 + $0x238] sm:$0xff]
  %v118 = vld [vmem:[%s1 + $0x240] sm:$0xff]
  %v119 = vld [vmem:[%s1 + $0x248] sm:$0xff]
  %v120 = vld [vmem:[%s1 + $0x250] sm:$0xff]
  %v121 = vld [vmem:[%s1 + $0x258] sm:$0xff]
  %v122 = vld [vmem:[%s1 + $0x260] sm:$0xff]
  %v123 = vld [vmem:[%s1 + $0x268] sm:$0xff]
  %v124 = vld [vmem:[%s1 + $0x270] sm:$0xff]
  %v125 = vld [vmem:[%s1 + $0x278] sm:$0xff]
  %v126 = vld [vmem:[%s1 + $0x280] sm:$0xff]
  %v127 = vld [vmem:[%s1 + $0x288] sm:$0xff]
  %v128 = vld [vmem:[%s1 + $0x290] sm:$0xff]
  %v129 = vld [vmem:[%s1 + $0x298] sm:$0xff]
  %v130 = vld [vmem:[%s1 + $0x2a0] sm:$0xff]
  %v131 = vld [vmem:[%s1 + $0x2a8] sm:$0xff]
  %v132 = vld [vmem:[%s1 + $0x2b0] sm:$0xff]
  %v133 = vld [vmem:[%s1 + $0x2b8] sm:$0xff]
  %v134 = vld [vmem:[%s1 + $0x2c0] sm:$0xff]
  %v135 = vld [vmem:[%s1 + $0x2c8] sm:$0xff]
  %v136 = vld [vmem:[%s1 + $0x2d0] sm:$0xff]
  %v137 = vld [vmem:[%s1 + $0x2d8] sm:$0xff]
  %v138 = vld [vmem:[%s1 + $0x2e0] sm:$0xff]
  %v139 = vld [vmem:[%s1 + $0x2e8] sm:$0xff]
  %v140 = vld [vmem:[%s1 + $0x2f0] sm:$0xff]
  %v141 = vld [vmem:[%s1 + $0x2f8] sm:$0xff]
  %v142 = vld [vmem:[%s1 + $0x300] sm:$0xff]
  %v143 = vld [vmem:[%s1 + $0x308] sm:$0xff]
  %v144 = vld [vmem:[%s1 + $0x310] sm:$0xff]
  %v145 = vld [vmem:[%s1 + $0x318] sm:$0xff]
  %v146 = vld [vmem:[%s1 + $0x320] sm:$0xff]
  %v147 = vld [vmem:[%s1 + $0x328] sm:$0xff]
  %v148 = vld [vmem:[%s1 + $0x330] sm:$0xff]
  %v149 = vld [vmem:[%s1 + $0x338] sm:$0xff]
  %v150 = vld [vmem:[%s1 + $0x340] sm:$0xff]
  %v151 = vld [vmem:[%s1 + $0x348] sm:$0xff]
  %v152 = vld [vmem:[%s1 + $0x350] sm:$0xff]
  %v153 = vld [vmem:[%s1 + $0x358] sm:$0xff]
  %v154 = vld [vmem:[%s1 + $0x360] sm:$0xff]
  %v155 = vld [vmem:[%s1 + $0x368] sm:$0xff]
  %v156 = vld [vmem:[%s1 + $0x370] sm:$0xff]
  %v157 = vld [vmem:[%s1 + $0x378] sm:$0xff]
  %v158 = vld [vmem:[%s1 + $0x380] sm:$0xff]
  %v159 = vld [vmem:[%s1 + $0x388] sm:$0xff]
  %v160 = vld [vmem:[%s1 + $0x390] sm:$0xff]
  %v161 = vld [vmem:[%s1 + $0x398] sm:$0xff]
  %v162 = vld [vmem:[%s1 + $0x3a0] sm:$0xff]
  %v163 = vld [vmem:[%s1 + $0x3a8] sm:$0xff]
  %v164 = vld [vmem:[%s1 + $0x3b0] sm:$0xff]
  %v165 = vld [vmem:[%s1 + $0x3b8] sm:$0xff]
  %v166 = vld [vmem:[%s1 + $0x3c0] sm:$0xff]
  %v167 = vld [vmem:[%s1 + $0x3c8] sm:$0xff]
  %v168 = vld [vmem:[%s1 + $0x3d0] sm:$0xff]
  %v169 = vld [vmem:[%s1 + $0x3d8] sm:$0xff]
  %v170 = vld [vmem:[%s1 + $0x3e0] sm:$0xff]
  %v171 = vld [vmem:[%s1 + $0x3e8] sm:$0xff]
  %v172 = vld [vmem:[%s1 + $0x3f0] sm:$0xff]
  %v173 = vld [vmem:[%s1 + $0x3f8] sm:$0xff]
  %v174 = vld [vmem:[%s1 + $0x400] sm:$0xff]
  %v175 = vld [vmem:[%s1 + $0x408] sm:$0xff]
  %v176 = vld [vmem:[%s1 + $0x410] sm:$0xff]
  %v177 = vld [vmem:[%s1 + $0x418] sm:$0xff]
  %v178 = vld [vmem:[%s1 + $0x420] sm:$0xff]
  %v179 = vld [vmem:[%s1 + $0x428] sm:$0xff]
  %v180 = vld [vmem:[%s1 + $0x430] sm:$0xff]
  %v181 = vld [vmem:[%s1 + $0x438] sm:$0xff]
  %v182 = vld [vmem:[%s1 + $0x440] sm:$0xff]
  %v183 = vld [vmem:[%s1 + $0x448] sm:$0xff]
  %v184 = vld [vmem:[%s1 + $0x450] sm:$0xff]
  %v185 = vld [vmem:[%s1 + $0x458] sm:$0xff]
  %v186 = vld [vmem:[%s1 + $0x460] sm:$0xff]
  %v187 = vld [vmem:[%s1 + $0x468] sm:$0xff]
  %v188 = vld [vmem:[%s1 + $0x470] sm:$0xff]
  %v189 = vld [vmem:[%s1 + $0x478] sm:$0xff]
  %v190 = vld [vmem:[%s1 + $0x480] sm:$0xff]
  %v191 = vld [vmem:[%s1 + $0x488] sm:$0xff]
  %v192 = vld [vmem:[%s1 + $0x490] sm:$0xff]
  %v193 = vld [vmem:[%s1 + $0x498] sm:$0xff]
  %v194 = vld [vmem:[%s1 + $0x4a0] sm:$0xff]
  %v195 = vld [vmem:[%s1 + $0x4a8] sm:$0xff]
  %v196 = vld [vmem:[%s1 + $0x4b0] sm:$0xff]
  %v197 = vld [vmem:[%s1 + $0x4b8] sm:$0xff]
  %v198 = vld [vmem:[%s1 + $0x4c0] sm:$0xff]
  %v199 = vld [vmem:[%s1 + $0x4c8] sm:$0xff]
  %v200 = vld [vmem:[%s1 + $0x4d0] sm:$0xff]
  %v201 = vld [vmem:[%s1 + $0x4d8] sm:$0xff]
  %v202 = vld [vmem:[%s1 + $0x4e0] sm:$0xff]
  %v203 = vld [vmem:[%s1 + $0x4e8] sm:$0xff]
  %v204 = vld [vmem:[%s1 + $0x4f0] sm:$0xff]
  %v205 = vld [vmem:[%s1 + $0x4f8] sm:$0xff]
  %v206 = vld [vmem:[%s1 + $0x500] sm:$0xff]
  %v207 = vld [vmem:[%s1 + $0x508] sm:$0xff]
  %v208 = vld [vmem:[%s1 + $0x510] sm:$0xff]
  %v209 = vld [vmem:[%s1 + $0x518] sm:$0xff]
  %v210 = vld [vmem:[%s1 + $0x520] sm:$0xff]
  %v211 = vld [vmem:[%s1 + $0x528] sm:$0xff]
  %v212 = vld [vmem:[%s1 + $0x530] sm:$0xff]
  %v213 = vld [vmem:[%s1 + $0x538] sm:$0xff]
  %v214 = vld [vmem:[%s1 + $0x540] sm:$0xff]
  %v215 = vld [vmem:[%s1 + $0x548] sm:$0xff]
  %v216 = vld [vmem:[%s1 + $0x550] sm:$0xff]
  %v217 = vld [vmem:[%s1 + $0x558] sm:$0xff]
  %v218 = vld [vmem:[%s1 + $0x560] sm:$0xff]
  %v219 = vld [vmem:[%s1 + $0x568] sm:$0xff]
  %v220 = vld [vmem:[%s1 + $0x570] sm:$0xff]
  %v221 = vld [vmem:[%s1 + $0x578] sm:$0xff]
  %v222 = vld [vmem:[%s1 + $0x580] sm:$0xff]
  %v223 = vld [vmem:[%s1 + $0x588] sm:$0xff]
  %v224 = vld [vmem:[%s1 + $0x590] sm:$0xff]
  %v225 = vld [vmem:[%s1 + $0x598] sm:$0xff]
  %v226 = vld [vmem:[%s1 + $0x5a0] sm:$0xff]
  %v227 = vld [vmem:[%s1 + $0x5a8] sm:$0xff]
  %v228 = vld [vmem:[%s1 + $0x5b0] sm:$0xff]
  %v229 = vld [vmem:[%s1 + $0x5b8] sm:$0xff]
  %v230 = vld [vmem:[%s1 + $0x5c0] sm:$0xff]
  %v231 = vld [vmem:[%s1 + $0x5c8] sm:$0xff]
  %v232 = vld [vmem:[%s1 + $0x5d0] sm:$0xff]
  %v233 = vld [vmem:[%s1 + $0x5d8] sm:$0xff]
  %v234 = vld [vmem:[%s1 + $0x5e0] sm:$0xff]
  %v235 = vld [vmem:[%s1 + $0x5e8] sm:$0xff]
  %v236 = vld [vmem:[%s1 + $0x5f0] sm:$0xff]
  %v237 = vld [vmem:[%s1 + $0x5f8] sm:$0xff]
  %v238 = vld [vmem:[%s1 + $0x600] sm:$0xff]
  %v239 = vld [vmem:[%s1 + $0x608] sm:$0xff]
  %v240 = vld [vmem:[%s1 + $0x610] sm:$0xff]
  %v241 = vld [vmem:[%s1 + $0x618] sm:$0xff]
  %v242 = vld [vmem:[%s1 + $0x620] sm:$0xff]
  %v243 = vld [vmem:[%s1 + $0x628] sm:$0xff]
  %v244 = vld [vmem:[%s1 + $0x630] sm:$0xff]
  %v245 = vld [vmem:[%s1 + $0x638] sm:$0xff]
  %v246 = vld [vmem:[%s1 + $0x640] sm:$0xff]
  %v247 = vld [vmem:[%s1 + $0x648] sm:$0xff]
  %v248 = vld [vmem:[%s1 + $0x650] sm:$0xff]
  %v249 = vld [vmem:[%s1 + $0x658] sm:$0xff]
  %v250 = vld [vmem:[%s1 + $0x660] sm:$0xff]
  %v251 = vld [vmem:[%s1 + $0x668] sm:$0xff]
  %v252 = vld [vmem:[%s1 + $0x670] sm:$0xff]
  %v253 = vld [vmem:[%s1 + $0x678] sm:$0xff]
  %v254 = vld [vmem:[%s1 + $0x680] sm:$0xff]
  %v255 = vld [vmem:[%s1 + $0x688] sm:$0xff]
  %v256 = vld [vmem:[%s1 + $0x690] sm:$0xff]
  %v257 = vld [vmem:[%s1 + $0x698] sm:$0xff]
  %v258 = vld [vmem:[%s1 + $0x6a0] sm:$0xff]
  %v259 = vld [vmem:[%s1 + $0x6a8] sm:$0xff]
  %v260 = vld [vmem:[%s1 + $0x6b0] sm:$0xff]
  %v261 = vld [vmem:[%s1 + $0x6b8] sm:$0xff]
  %v262 = vld [vmem:[%s1 + $0x6c0] sm:$0xff]
  %v263 = vld [vmem:[%s1 + $0x6c8] sm:$0xff]
  %v264 = vld [vmem:[%s1 + $0x6d0] sm:$0xff]
  %v265 = vld [vmem:[%s1 + $0x6d8] sm:$0xff]
  %v266 = vld [vmem:[%s1 + $0x6e0] sm:$0xff]
  %v267 = vld [vmem:[%s1 + $0x6e8] sm:$0xff]
  %v268 = vld [vmem:[%s1 + $0x6f0] sm:$0xff]
  %v269 = vld [vmem:[%s1 + $0x6f8] sm:$0xff]
  %v270 = vld [vmem:[%s1 + $0x700] sm:$0xff]
  %v271 = vld [vmem:[%s1 + $0x708] sm:$0xff]
  %v272 = vld [vmem:[%s1 + $0x710] sm:$0xff]
  %v273 = vld [vmem:[%s1 + $0x718] sm:$0xff]
  %v274 = vld [vmem:[%s1 + $0x720] sm:$0xff]
  %v275 = vld [vmem:[%s1 + $0x728] sm:$0xff]
  %v276 = vld [vmem:[%s1 + $0x730] sm:$0xff]
  %v277 = vld [vmem:[%s1 + $0x738] sm:$0xff]
  %v278 = vld [vmem:[%s1 + $0x740] sm:$0xff]
  %v279 = vld [vmem:[%s1 + $0x748] sm:$0xff]
  %v280 = vld [vmem:[%s1 + $0x750] sm:$0xff]
  %v281 = vld [vmem:[%s1 + $0x758] sm:$0xff]
  %v282 = vld [vmem:[%s1 + $0x760] sm:$0xff]
  %v283 = vld [vmem:[%s1 + $0x768] sm:$0xff]
  %v284 = vld [vmem:[%s1 + $0x770] sm:$0xff]
  %v285 = vld [vmem:[%s1 + $0x778] sm:$0xff]
  %v286 = vld [vmem:[%s1 + $0x780] sm:$0xff]
  %v287 = vld [vmem:[%s1 + $0x788] sm:$0xff]
  %v288 = vld [vmem:[%s1 + $0x790] sm:$0xff]
  %v289 = vld [vmem:[%s1 + $0x798] sm:$0xff]
  %v290 = vld [vmem:[%s1 + $0x7a0] sm:$0xff]
  %v291 = vld [vmem:[%s1 + $0x7a8] sm:$0xff]
  %v292 = vld [vmem:[%s1 + $0x7b0] sm:$0xff]
  %v293 = vld [vmem:[%s1 + $0x7b8] sm:$0xff]
  %v294 = vld [vmem:[%s1 + $0x7c0] sm:$0xff]
  %v295 = vld [vmem:[%s1 + $0x7c8] sm:$0xff]
  %v296 = vld [vmem:[%s1 + $0x7d0] sm:$0xff]
  %v297 = vld [vmem:[%s1 + $0x7d8] sm:$0xff]
  %v298 = vld [vmem:[%s1 + $0x7e0] sm:$0xff]
  %v299 = vld [vmem:[%s1 + $0x7e8] sm:$0xff]
  %v300 = vld [vmem:[%s1 + $0x7f0] sm:$0xff]
  %v301 = vld [vmem:[%s1 + $0x7f8] sm:$0xff]
  %v302 = vld [vmem:[%s1 + $0x800] sm:$0xff]
  %v303 = vld [vmem:[%s1 + $0x808] sm:$0xff]
  %v304 = vld [vmem:[%s1 + $0x810] sm:$0xff]
  %v305 = vld [vmem:[%s1 + $0x818] sm:$0xff]
  %v306 = vld [vmem:[%s1 + $0x820] sm:$0xff]
  %v307 = vld [vmem:[%s1 + $0x828] sm:$0xff]
  %v308 = vld [vmem:[%s1 + $0x830] sm:$0xff]
  %v309 = vld [vmem:[%s1 + $0x838] sm:$0xff]
  %v310 = vld [vmem:[%s1 + $0x840] sm:$0xff]
  %v311 = vld [vmem:[%s1 + $0x848] sm:$0xff]
  %v312 = vld [vmem:[%s1 + $0x850] sm:$0xff]
  %v313 = vld [vmem:[%s1 + $0x858] sm:$0xff]
  %v314 = vld [vmem:[%s1 + $0x860] sm:$0xff]
  %v315 = vld [vmem:[%s1 + $0x868] sm:$0xff]
  %v316 = vld [vmem:[%s1 + $0x870] sm:$0xff]
  %v317 = vld [vmem:[%s1 + $0x878] sm:$0xff]
  %v318 = vld [vmem:[%s1 + $0x880] sm:$0xff]
  %v319 = vld [vmem:[%s1 + $0x888] sm:$0xff]
  %v320 = vld [vmem:[%s1 + $0x890] sm:$0xff]
  %v321 = vld [vmem:[%s1 + $0x898] sm:$0xff]
  %v322 = vld [vmem:[%s1 + $0x8a0] sm:$0xff]
  %v323 = vld [vmem:[%s1 + $0x8a8] sm:$0xff]
  %v324 = vld [vmem:[%s1 + $0x8b0] sm:$0xff]
  %v325 = vld [vmem:[%s1 + $0x8b8] sm:$0xff]
  %v326 = vld [vmem:[%s1 + $0x8c0] sm:$0xff]
  %v327 = vld [vmem:[%s1 + $0x8c8] sm:$0xff]
  %v328 = vld [vmem:[%s1 + $0x8d0] sm:$0xff]
  %v329 = vld [vmem:[%s1 + $0x8d8] sm:$0xff]
  %v330 = vld [vmem:[%s1 + $0x8e0] sm:$0xff]
  %v331 = vld [vmem:[%s1 + $0x8e8] sm:$0xff]
  %v332 = vld [vmem:[%s1 + $0x8f0] sm:$0xff]
  %v333 = vld [vmem:[%s1 + $0x8f8] sm:$0xff]
  %v334 = vld [vmem:[%s1 + $0x900] sm:$0xff]
  %v335 = vld [vmem:[%s1 + $0x908] sm:$0xff]
  %v336 = vld [vmem:[%s1 + $0x910] sm:$0xff]
  %v337 = vld [vmem:[%s1 + $0x918] sm:$0xff]
  %v338 = vld [vmem:[%s1 + $0x920] sm:$0xff]
  %v339 = vld [vmem:[%s1 + $0x928] sm:$0xff]
  %v340 = vld [vmem:[%s1 + $0x930] sm:$0xff]
  %v341 = vld [vmem:[%s1 + $0x938] sm:$0xff]
  %v342 = vld [vmem:[%s1 + $0x940] sm:$0xff]
  %v343 = vld [vmem:[%s1 + $0x948] sm:$0xff]
  %v344 = vld [vmem:[%s1 + $0x950] sm:$0xff]
  %v345 = vld [vmem:[%s1 + $0x958] sm:$0xff]
  %v346 = vld [vmem:[%s1 + $0x960] sm:$0xff]
  %v347 = vld [vmem:[%s1 + $0x968] sm:$0xff]
  %v348 = vld [vmem:[%s1 + $0x970] sm:$0xff]
  %v349 = vld [vmem:[%s1 + $0x978] sm:$0xff]
  %v350 = vld [vmem:[%s1 + $0x980] sm:$0xff]
  %v351 = vld [vmem:[%s1 + $0x988] sm:$0xff]
  %v352 = vld [vmem:[%s1 + $0x990] sm:$0xff]
  %v353 = vld [vmem:[%s1 + $0x998] sm:$0xff]
  %v354 = vld [vmem:[%s1 + $0x9a0] sm:$0xff]
  %v355 = vld [vmem:[%s1 + $0x9a8] sm:$0xff]
  %v356 = vld [vmem:[%s1 + $0x9b0] sm:$0xff]
  %v357 = vld [vmem:[%s1 + $0x9b8] sm:$0xff]
  %v358 = vld [vmem:[%s1 + $0x9c0] sm:$0xff]
  %v359 = vld [vmem:[%s1 + $0x9c8] sm:$0xff]
  %v360 = vld [vmem:[%s1 + $0x9d0] sm:$0xff]
  %v361 = vld [vmem:[%s1 + $0x9d8] sm:$0xff]
  %v362 = vld [vmem:[%s1 + $0x9e0] sm:$0xff]
  %v363 = vld [vmem:[%s1 + $0x9e8] sm:$0xff]
  %v364 = vld [vmem:[%s1 + $0x9f0] sm:$0xff]
  %v365 = vld [vmem:[%s1 + $0x9f8] sm:$0xff]
  %v366 = vld [vmem:[%s1 + $0xa00] sm:$0xff]
  %v367 = vld [vmem:[%s1 + $0xa08] sm:$0xff]
  %v368 = vld [vmem:[%s1 + $0xa10] sm:$0xff]
  %v369 = vld [vmem:[%s1 + $0xa18] sm:$0xff]
  %v370 = vld [vmem:[%s1 + $0xa20] sm:$0xff]
  %v371 = vld [vmem:[%s1 + $0xa28] sm:$0xff]
  %v372 = vld [vmem:[%s1 + $0xa30] sm:$0xff]
  %v373 = vld [vmem:[%s1 + $0xa38] sm:$0xff]
  %v374 = vld [vmem:[%s1 + $0xa40] sm:$0xff]
  %v375 = vld [vmem:[%s1 + $0xa48] sm:$0xff]
  %v376 = vld [vmem:[%s1 + $0xa50] sm:$0xff]
  %v377 = vld [vmem:[%s1 + $0xa58] sm:$0xff]
  %v378 = vld [vmem:[%s1 + $0xa60] sm:$0xff]
  %v379 = vld [vmem:[%s1 + $0xa68] sm:$0xff]
  %v380 = vld [vmem:[%s1 + $0xa70] sm:$0xff]
  %v381 = vld [vmem:[%s1 + $0xa78] sm:$0xff]
  %v382 = vld [vmem:[%s1 + $0xa80] sm:$0xff]
  %v383 = vld [vmem:[%s1 + $0xa88] sm:$0xff]
  %v384 = vld [vmem:[%s1 + $0xa90] sm:$0xff]
  %v385 = vld [vmem:[%s1 + $0xa98] sm:$0xff]
  %v386 = vld [vmem:[%s1 + $0xaa0] sm:$0xff]
  %v387 = vld [vmem:[%s1 + $0xaa8] sm:$0xff]
  %v388 = vld [vmem:[%s1 + $0xab0] sm:$0xff]
  %v389 = vld [vmem:[%s1 + $0xab8] sm:$0xff]
  %v390 = vld [vmem:[%s1 + $0xac0] sm:$0xff]
  %v391 = vld [vmem:[%s1 + $0xac8] sm:$0xff]
  %v392 = vld [vmem:[%s1 + $0xad0] sm:$0xff]
  %v393 = vld [vmem:[%s1 + $0xad8] sm:$0xff]
  %v394 = vld [vmem:[%s1 + $0xae0] sm:$0xff]
  %v395 = vld [vmem:[%s1 + $0xae8] sm:$0xff]
  %v396 = vld [vmem:[%s1 + $0xaf0] sm:$0xff]
  %v397 = vld [vmem:[%s1 + $0xaf8] sm:$0xff]
  %v398 = vld [vmem:[%s1 + $0xb00] sm:$0xff]
  %v399 = vld [vmem:[%s1 + $0xb08] sm:$0xff]
  %v400 = vld [vmem:[%s1 + $0xb10] sm:$0xff]
  %v401 = vld [vmem:[%s1 + $0xb18] sm:$0xff]
  %v402 = vld [vmem:[%s1 + $0xb20] sm:$0xff]
  %v403 = vld [vmem:[%s1 + $0xb28] sm:$0xff]
  %v404 = vld [vmem:[%s1 + $0xb30] sm:$0xff]
  %v405 = vld [vmem:[%s1 + $0xb38] sm:$0xff]
  %v406 = vld [vmem:[%s1 + $0xb40] sm:$0xff]
  %v407 = vld [vmem:[%s1 + $0xb48] sm:$0xff]
  %v408 = vld [vmem:[%s1 + $0xb50] sm:$0xff]
  %v409 = vld [vmem:[%s1 + $0xb58] sm:$0xff]
  %v410 = vld [vmem:[%s1 + $0xb60] sm:$0xff]
  %v411 = vld [vmem:[%s1 + $0xb68] sm:$0xff]
  %v412 = vld [vmem:[%s1 + $0xb70] sm:$0xff]
  %v413 = vld [vmem:[%s1 + $0xb78] sm:$0xff]
  %v414 = vld [vmem:[%s1 + $0xb80] sm:$0xff]
  %v415 = vld [vmem:[%s1 + $0xb88] sm:$0xff]
  %v416 = vld [vmem:[%s1 + $0xb90] sm:$0xff]
  %v417 = vld [vmem:[%s1 + $0xb98] sm:$0xff]
  %v418 = vld [vmem:[%s1 + $0xba0] sm:$0xff]
  %v419 = vld [vmem:[%s1 + $0xba8] sm:$0xff]
  %v420 = vld [vmem:[%s1 + $0xbb0] sm:$0xff]
  %v421 = vld [vmem:[%s1 + $0xbb8] sm:$0xff]
  %v422 = vld [vmem:[%s1 + $0xbc0] sm:$0xff]
  %v423 = vld [vmem:[%s1 + $0xbc8] sm:$0xff]
  %v424 = vld [vmem:[%s1 + $0xbd0] sm:$0xff]
  %v425 = vld [vmem:[%s1 + $0xbd8] sm:$0xff]
  %v426 = vld [vmem:[%s1 + $0xbe0] sm:$0xff]
  %v427 = vld [vmem:[%s1 + $0xbe8] sm:$0xff]
  %v428 = vld [vmem:[%s1 + $0xbf0] sm:$0xff]
  %v429 = vld [vmem:[%s1 + $0xbf8] sm:$0xff]
  %v430 = vld [vmem:[%s1 + $0xc00] sm:$0xff]
  %v431 = vld [vmem:[%s1 + $0xc08] sm:$0xff]
  %v432 = vld [vmem:[%s1 + $0xc10] sm:$0xff]
  %v433 = vld [vmem:[%s1 + $0xc18] sm:$0xff]
  %v434 = vld [vmem:[%s1 + $0xc20] sm:$0xff]
  %v435 = vld [vmem:[%s1 + $0xc28] sm:$0xff]
  %v436 = vld [vmem:[%s1 + $0xc30] sm:$0xff]
  %v437 = vld [vmem:[%s1 + $0xc38] sm:$0xff]
  %v438 = vld [vmem:[%s1 + $0xc40] sm:$0xff]
  %v439 = vld [vmem:[%s1 + $0xc48] sm:$0xff]
  %v440 = vld [vmem:[%s1 + $0xc50] sm:$0xff]
  %v441 = vld [vmem:[%s1 + $0xc58] sm:$0xff]
  %v442 = vld [vmem:[%s1 + $0xc60] sm:$0xff]
  %v443 = vld [vmem:[%s1 + $0xc68] sm:$0xff]
  %v444 = vld [vmem:[%s1 + $0xc70] sm:$0xff]
  %v445 = vld [vmem:[%s1 + $0xc78] sm:$0xff]
  %v446 = vld [vmem:[%s1 + $0xc80] sm:$0xff]
  %v447 = vld [vmem:[%s1 + $0xc88] sm:$0xff]
  %v448 = vld [vmem:[%s1 + $0xc90] sm:$0xff]
  %v449 = vld [vmem:[%s1 + $0xc98] sm:$0xff]
  %v450 = vld [vmem:[%s1 + $0xca0] sm:$0xff]
  %v451 = vld [vmem:[%s1 + $0xca8] sm:$0xff]
  %v452 = vld [vmem:[%s1 + $0xcb0] sm:$0xff]
  %v453 = vld [vmem:[%s1 + $0xcb8] sm:$0xff]
  %v454 = vld [vmem:[%s1 + $0xcc0] sm:$0xff]
  %v455 = vld [vmem:[%s1 + $0xcc8] sm:$0xff]
  %v456 = vld [vmem:[%s1 + $0xcd0] sm:$0xff]
  %v457 = vld [vmem:[%s1 + $0xcd8] sm:$0xff]
  %v458 = vld [vmem:[%s1 + $0xce0] sm:$0xff]
  %v459 = vld [vmem:[%s1 + $0xce8] sm:$0xff]
  %v460 = vld [vmem:[%s1 + $0xcf0] sm:$0xff]
  %v461 = vld [vmem:[%s1 + $0xcf8] sm:$0xff]
  %v462 = vld [vmem:[%s1 + $0xd00] sm:$0xff]
  %v463 = vld [vmem:[%s1 + $0xd08] sm:$0xff]
  %v464 = vld [vmem:[%s1 + $0xd10] sm:$0xff]
  %v465 = vld [vmem:[%s1 + $0xd18] sm:$0xff]
  %v466 = vld [vmem:[%s1 + $0xd20] sm:$0xff]
  %v467 = vld [vmem:[%s1 + $0xd28] sm:$0xff]
  %v468 = vld [vmem:[%s1 + $0xd30] sm:$0xff]
  %v469 = vld [vmem:[%s1 + $0xd38] sm:$0xff]
  %v470 = vld [vmem:[%s1 + $0xd40] sm:$0xff]
  %v471 = vld [vmem:[%s1 + $0xd48] sm:$0xff]
  %v472 = vld [vmem:[%s1 + $0xd50] sm:$0xff]
  %v473 = vld [vmem:[%s1 + $0xd58] sm:$0xff]
  %v474 = vld [vmem:[%s1 + $0xd60] sm:$0xff]
  %v475 = vld [vmem:[%s1 + $0xd68] sm:$0xff]
  %v476 = vld [vmem:[%s1 + $0xd70] sm:$0xff]
  %v477 = vld [vmem:[%s1 + $0xd78] sm:$0xff]
  %v478 = vld [vmem:[%s1 + $0xd80] sm:$0xff]
  %v479 = vld [vmem:[%s1 + $0xd88] sm:$0xff]
  %v480 = vld [vmem:[%s1 + $0xd90] sm:$0xff]
  %v481 = vld [vmem:[%s1 + $0xd98] sm:$0xff]
  %v482 = vld [vmem:[%s1 + $0xda0] sm:$0xff]
  %v483 = vld [vmem:[%s1 + $0xda8] sm:$0xff]
  %v484 = vld [vmem:[%s1 + $0xdb0] sm:$0xff]
  %v485 = vld [vmem:[%s1 + $0xdb8] sm:$0xff]
  %v486 = vld [vmem:[%s1 + $0xdc0] sm:$0xff]
  %v487 = vld [vmem:[%s1 + $0xdc8] sm:$0xff]
  %v488 = vld [vmem:[%s1 + $0xdd0] sm:$0xff]
  %v489 = vld [vmem:[%s1 + $0xdd8] sm:$0xff]
  %v490 = vld [vmem:[%s1 + $0xde0] sm:$0xff]
  %v491 = vld [vmem:[%s1 + $0xde8] sm:$0xff]
  %v492 = vld [vmem:[%s1 + $0xdf0] sm:$0xff]
  %v493 = vld [vmem:[%s1 + $0xdf8] sm:$0xff]
  %v494 = vld [vmem:[%s1 + $0xe00] sm:$0xff]
  %v495 = vld [vmem:[%s1 + $0xe08] sm:$0xff]
  %v496 = vld [vmem:[%s1 + $0xe10] sm:$0xff]
  %v497 = vld [vmem:[%s1 + $0xe18] sm:$0xff]
  %v498 = vld [vmem:[%s1 + $0xe20] sm:$0xff]
  %v499 = vld [vmem:[%s1 + $0xe28] sm:$0xff]
  %v500 = vld [vmem:[%s1 + $0xe30] sm:$0xff]
  %v501 = vld [vmem:[%s1 + $0xe38] sm:$0xff]
  %v502 = vld [vmem:[%s1 + $0xe40] sm:$0xff]
  %v503 = vld [vmem:[%s1 + $0xe48] sm:$0xff]
  %v504 = vld [vmem:[%s1 + $0xe50] sm:$0xff]
  %v505 = vld [vmem:[%s1 + $0xe58] sm:$0xff]
  %v506 = vld [vmem:[%s1 + $0xe60] sm:$0xff]
  %v507 = vld [vmem:[%s1 + $0xe68] sm:$0xff]
  %v508 = vld [vmem:[%s1 + $0xe70] sm:$0xff]
  %v509 = vld [vmem:[%s1 + $0xe78] sm:$0xff]
  %v510 = vld [vmem:[%s1 + $0xe80] sm:$0xff]
  %v511 = vld [vmem:[%s1 + $0xe88] sm:$0xff]
  %v512 = vld [vmem:[%s1 + $0xe90] sm:$0xff]
  %v513 = vld [vmem:[%s1 + $0xe98] sm:$0xff]
  %v514 = vld [vmem:[%s1 + $0xea0] sm:$0xff]
  %v515 = vld [vmem:[%s1 + $0xea8] sm:$0xff]
  %v516 = vld [vmem:[%s1 + $0xeb0] sm:$0xff]
  %v517 = vld [vmem:[%s1 + $0xeb8] sm:$0xff]
  %v518 = vld [vmem:[%s1 + $0xec0] sm:$0xff]
  %v519 = vld [vmem:[%s1 + $0xec8] sm:$0xff]
  %v520 = vld [vmem:[%s1 + $0xed0] sm:$0xff]
  %v521 = vld [vmem:[%s1 + $0xed8] sm:$0xff]
  %v522 = vld [vmem:[%s1 + $0xee0] sm:$0xff]
  %v523 = vld [vmem:[%s1 + $0xee8] sm:$0xff]
  %v524 = vld [vmem:[%s1 + $0xef0] sm:$0xff]
  %v525 = vld [vmem:[%s1 + $0xef8] sm:$0xff]
  %v526 = vld [vmem:[%s1 + $0xf00] sm:$0xff]
  %v527 = vld [vmem:[%s1 + $0xf08] sm:$0xff]
  %v528 = vld [vmem:[%s1 + $0xf10] sm:$0xff]
  %v529 = vld [vmem:[%s1 + $0xf18] sm:$0xff]
  %v530 = vld [vmem:[%s1 + $0xf20] sm:$0xff]
  %v531 = vld [vmem:[%s1 + $0xf28] sm:$0xff]
  %v532 = vld [vmem:[%s1 + $0xf30] sm:$0xff]
  %v533 = vld [vmem:[%s1 + $0xf38] sm:$0xff]
  %v534 = vld [vmem:[%s1 + $0xf40] sm:$0xff]
  %v535 = vld [vmem:[%s1 + $0xf48] sm:$0xff]
  %v536 = vld [vmem:[%s1 + $0xf50] sm:$0xff]
  %v537 = vld [vmem:[%s1 + $0xf58] sm:$0xff]
  %v538 = vld [vmem:[%s1 + $0xf60] sm:$0xff]
  %v539 = vld [vmem:[%s1 + $0xf68] sm:$0xff]
  %v540 = vld [vmem:[%s1 + $0xf70] sm:$0xff]
  %v541 = vld [vmem:[%s1 + $0xf78] sm:$0xff]
  %v542 = vld [vmem:[%s1 + $0xf80] sm:$0xff]
  %v543 = vld [vmem:[%s1 + $0xf88] sm:$0xff]
  %v544 = vld [vmem:[%s1 + $0xf90] sm:$0xff]
  %v545 = vld [vmem:[%s1 + $0xf98] sm:$0xff]
  %v546 = vld [vmem:[%s1 + $0xfa0] sm:$0xff]
  %v547 = vld [vmem:[%s1 + $0xfa8] sm:$0xff]
  %v548 = vld [vmem:[%s1 + $0xfb0] sm:$0xff]
  %v549 = vld [vmem:[%s1 + $0xfb8] sm:$0xff]
  %v550 = vld [vmem:[%s1 + $0xfc0] sm:$0xff]
  %v551 = vld [vmem:[%s1 + $0xfc8] sm:$0xff]
  %v552 = vld [vmem:[%s1 + $0xfd0] sm:$0xff]
  %v553 = vld [vmem:[%s1 + $0xfd8] sm:$0xff]
  %v554 = vld [vmem:[%s1 + $0xfe0] sm:$0xff]
  %v555 = vld [vmem:[%s1 + $0xfe8] sm:$0xff]
  %v556 = vld [vmem:[%s1 + $0xff0] sm:$0xff]
  %v557 = vld [vmem:[%s1 + $0xff8] sm:$0xff]
  %v558 = vld [vmem:[%s2] sm:$0x1]
  %v560 = vlaneseq
  %v561 = vshrl.u32 %v560, 7
  %v562 = vsub.s32 0, %v561
  %v563 = vrot.slane %v558, %v562
  %565 = vmatprep.subr.mxu0 0.0
  %566 = vmatpush1.msra.mxu0 %v61
  %567 = vmatprep.subr.mxu0 0.0
  %568 = vmatpush1.msra.mxu0 %v60
  %569 = vmatprep.subr.mxu0 0.0
  %570 = vmatpush1.msra.mxu0 %v59
  %571 = vmatprep.subr.mxu0 0.0
  %572 = vmatpush1.msra.mxu0 %v58
  %573 = vmatprep.subr.mxu0 0.0
  %574 = vmatpush1.msra.mxu0 %v57
  %575 = vmatprep.subr.mxu0 0.0
  %576 = vmatpush1.msra.mxu0 %v56
  %577 = vmatprep.subr.mxu0 0.0
  %578 = vmatpush1.msra.mxu0 %v55
  %579 = vmatprep.subr.mxu0 0.0
  %580 = vmatpush1.msra.mxu0 %v54
  %581 = vmatprep.subr.mxu0 0.0
  %582 = vmatpush1.msra.mxu0 %v53
  %583 = vmatprep.subr.mxu0 0.0
  %584 = vmatpush1.msra.mxu0 %v52
  %585 = vmatprep.subr.mxu0 0.0
  %586 = vmatpush1.msra.mxu0 %v51
  %587 = vmatprep.subr.mxu0 0.0
  %588 = vmatpush1.msra.mxu0 %v50
  %589 = vmatprep.subr.mxu0 0.0
  %590 = vmatpush1.msra.mxu0 %v49
  %591 = vmatprep.subr.mxu0 0.0
  %592 = vmatpush1.msra.mxu0 %v48
  %593 = vmatprep.subr.mxu0 0.0
  %594 = vmatpush1.msra.mxu0 %v47
  %595 = vmatprep.subr.mxu0 0.0
  %596 = vmatpush1.msra.mxu0 %v46
  %597 = vmatprep.subr.mxu0 0.0
  %598 = vmatpush2.msra.mxu0 %v77
  %599 = vmatprep.subr.mxu0 0.0
  %600 = vmatpush2.msra.mxu0 %v76
  %601 = vmatprep.subr.mxu0 0.0
  %602 = vmatpush2.msra.mxu0 %v75
  %603 = vmatprep.subr.mxu0 0.0
  %604 = vmatpush2.msra.mxu0 %v74
  %605 = vmatprep.subr.mxu0 0.0
  %606 = vmatpush2.msra.mxu0 %v73
  %607 = vmatprep.subr.mxu0 0.0
  %608 = vmatpush2.msra.mxu0 %v72
  %609 = vmatprep.subr.mxu0 0.0
  %610 = vmatpush2.msra.mxu0 %v71
  %611 = vmatprep.subr.mxu0 0.0
  %612 = vmatpush2.msra.mxu0 %v70
  %613 = vmatprep.subr.mxu0 0.0
  %614 = vmatpush2.msra.mxu0 %v69
  %615 = vmatprep.subr.mxu0 0.0
  %616 = vmatpush2.msra.mxu0 %v68
  %617 = vmatprep.subr.mxu0 0.0
  %618 = vmatpush2.msra.mxu0 %v67
  %619 = vmatprep.subr.mxu0 0.0
  %620 = vmatpush2.msra.mxu0 %v66
  %621 = vmatprep.subr.mxu0 0.0
  %622 = vmatpush2.msra.mxu0 %v65
  %623 = vmatprep.subr.mxu0 0.0
  %624 = vmatpush2.msra.mxu0 %v64
  %625 = vmatprep.subr.mxu0 0.0
  %626 = vmatpush2.msra.mxu0 %v63
  %627 = vmatprep.subr.mxu0 0.0
  %628 = vmatpush2.msra.mxu0 %v62
  %629 = vmatprep.mubr.f32.mxu0 %v15
  %630 = vmatmul.mubr.f32.gmra.mxu0 %v14
  %v631 = vpop.f32.mrf.mxu0
  %v632 = vadd.f32 %v563, %v631
  %v633 = vpop.f32.mrf.mxu0
  %634 = vdwg.mxu0
  %635 = vmatprep.subr.mxu0 0.0
  %636 = vmatpush1.msra.mxu0 %v93
  %637 = vmatprep.subr.mxu0 0.0
  %638 = vmatpush1.msra.mxu0 %v92
  %639 = vmatprep.subr.mxu0 0.0
  %640 = vmatpush1.msra.mxu0 %v91
  %641 = vmatprep.subr.mxu0 0.0
  %642 = vmatpush1.msra.mxu0 %v90
  %643 = vmatprep.subr.mxu0 0.0
  %644 = vmatpush1.msra.mxu0 %v89
  %645 = vmatprep.subr.mxu0 0.0
  %646 = vmatpush1.msra.mxu0 %v88
  %647 = vmatprep.subr.mxu0 0.0
  %648 = vmatpush1.msra.mxu0 %v87
  %649 = vmatprep.subr.mxu0 0.0
  %650 = vmatpush1.msra.mxu0 %v86
  %651 = vmatprep.subr.mxu0 0.0
  %652 = vmatpush1.msra.mxu0 %v85
  %653 = vmatprep.subr.mxu0 0.0
  %654 = vmatpush1.msra.mxu0 %v84
  %655 = vmatprep.subr.mxu0 0.0
  %656 = vmatpush1.msra.mxu0 %v83
  %657 = vmatprep.subr.mxu0 0.0
  %658 = vmatpush1.msra.mxu0 %v82
  %659 = vmatprep.subr.mxu0 0.0
  %660 = vmatpush1.msra.mxu0 %v81
  %661 = vmatprep.subr.mxu0 0.0
  %662 = vmatpush1.msra.mxu0 %v80
  %663 = vmatprep.subr.mxu0 0.0
  %664 = vmatpush1.msra.mxu0 %v79
  %665 = vmatprep.subr.mxu0 0.0
  %666 = vmatpush1.msra.mxu0 %v78
  %667 = vmatprep.subr.mxu0 0.0
  %668 = vmatpush2.msra.mxu0 %v109
  %669 = vmatprep.subr.mxu0 0.0
  %670 = vmatpush2.msra.mxu0 %v108
  %671 = vmatprep.subr.mxu0 0.0
  %672 = vmatpush2.msra.mxu0 %v107
  %673 = vmatprep.subr.mxu0 0.0
  %674 = vmatpush2.msra.mxu0 %v106
  %675 = vmatprep.subr.mxu0 0.0
  %676 = vmatpush2.msra.mxu0 %v105
  %677 = vmatprep.subr.mxu0 0.0
  %678 = vmatpush2.msra.mxu0 %v104
  %679 = vmatprep.subr.mxu0 0.0
  %680 = vmatpush2.msra.mxu0 %v103
  %681 = vmatprep.subr.mxu0 0.0
  %682 = vmatpush2.msra.mxu0 %v102
  %683 = vmatprep.subr.mxu0 0.0
  %684 = vmatpush2.msra.mxu0 %v101
  %685 = vmatprep.subr.mxu0 0.0
  %686 = vmatpush2.msra.mxu0 %v100
  %687 = vmatprep.subr.mxu0 0.0
  %688 = vmatpush2.msra.mxu0 %v99
  %689 = vmatprep.subr.mxu0 0.0
  %690 = vmatpush2.msra.mxu0 %v98
  %691 = vmatprep.subr.mxu0 0.0
  %692 = vmatpush2.msra.mxu0 %v97
  %693 = vmatprep.subr.mxu0 0.0
  %694 = vmatpush2.msra.mxu0 %v96
  %695 = vmatprep.subr.mxu0 0.0
  %696 = vmatpush2.msra.mxu0 %v95
  %697 = vmatprep.subr.mxu0 0.0
  %698 = vmatpush2.msra.mxu0 %v94
  %699 = vmatprep.mubr.f32.mxu0 %v17
  %700 = vmatmul.mubr.f32.gmra.mxu0 %v16
  %v701 = vpop.f32.mrf.mxu0
  %v702 = vadd.f32 %v632, %v701
  %v703 = vpop.f32.mrf.mxu0
  %704 = vdwg.mxu0
  %705 = vmatprep.subr.mxu0 0.0
  %706 = vmatpush1.msra.mxu0 %v125
  %707 = vmatprep.subr.mxu0 0.0
  %708 = vmatpush1.msra.mxu0 %v124
  %709 = vmatprep.subr.mxu0 0.0
  %710 = vmatpush1.msra.mxu0 %v123
  %711 = vmatprep.subr.mxu0 0.0
  %712 = vmatpush1.msra.mxu0 %v122
  %713 = vmatprep.subr.mxu0 0.0
  %714 = vmatpush1.msra.mxu0 %v121
  %715 = vmatprep.subr.mxu0 0.0
  %716 = vmatpush1.msra.mxu0 %v120
  %717 = vmatprep.subr.mxu0 0.0
  %718 = vmatpush1.msra.mxu0 %v119
  %719 = vmatprep.subr.mxu0 0.0
  %720 = vmatpush1.msra.mxu0 %v118
  %721 = vmatprep.subr.mxu0 0.0
  %722 = vmatpush1.msra.mxu0 %v117
  %723 = vmatprep.subr.mxu0 0.0
  %724 = vmatpush1.msra.mxu0 %v116
  %725 = vmatprep.subr.mxu0 0.0
  %726 = vmatpush1.msra.mxu0 %v115
  %727 = vmatprep.subr.mxu0 0.0
  %728 = vmatpush1.msra.mxu0 %v114
  %729 = vmatprep.subr.mxu0 0.0
  %730 = vmatpush1.msra.mxu0 %v113
  %731 = vmatprep.subr.mxu0 0.0
  %732 = vmatpush1.msra.mxu0 %v112
  %733 = vmatprep.subr.mxu0 0.0
  %734 = vmatpush1.msra.mxu0 %v111
  %735 = vmatprep.subr.mxu0 0.0
  %736 = vmatpush1.msra.mxu0 %v110
  %737 = vmatprep.subr.mxu0 0.0
  %738 = vmatpush2.msra.mxu0 %v141
  %739 = vmatprep.subr.mxu0 0.0
  %740 = vmatpush2.msra.mxu0 %v140
  %741 = vmatprep.subr.mxu0 0.0
  %742 = vmatpush2.msra.mxu0 %v139
  %743 = vmatprep.subr.mxu0 0.0
  %744 = vmatpush2.msra.mxu0 %v138
  %745 = vmatprep.subr.mxu0 0.0
  %746 = vmatpush2.msra.mxu0 %v137
  %747 = vmatprep.subr.mxu0 0.0
  %748 = vmatpush2.msra.mxu0 %v136
  %749 = vmatprep.subr.mxu0 0.0
  %750 = vmatpush2.msra.mxu0 %v135
  %751 = vmatprep.subr.mxu0 0.0
  %752 = vmatpush2.msra.mxu0 %v134
  %753 = vmatprep.subr.mxu0 0.0
  %754 = vmatpush2.msra.mxu0 %v133
  %755 = vmatprep.subr.mxu0 0.0
  %756 = vmatpush2.msra.mxu0 %v132
  %757 = vmatprep.subr.mxu0 0.0
  %758 = vmatpush2.msra.mxu0 %v131
  %759 = vmatprep.subr.mxu0 0.0
  %760 = vmatpush2.msra.mxu0 %v130
  %761 = vmatprep.subr.mxu0 0.0
  %762 = vmatpush2.msra.mxu0 %v129
  %763 = vmatprep.subr.mxu0 0.0
  %764 = vmatpush2.msra.mxu0 %v128
  %765 = vmatprep.subr.mxu0 0.0
  %766 = vmatpush2.msra.mxu0 %v127
  %767 = vmatprep.subr.mxu0 0.0
  %768 = vmatpush2.msra.mxu0 %v126
  %769 = vmatprep.mubr.f32.mxu0 %v19
  %770 = vmatmul.mubr.f32.gmra.mxu0 %v18
  %v771 = vpop.f32.mrf.mxu0
  %v772 = vadd.f32 %v702, %v771
  %v773 = vpop.f32.mrf.mxu0
  %774 = vdwg.mxu0
  %775 = vmatprep.subr.mxu0 0.0
  %776 = vmatpush1.msra.mxu0 %v157
  %777 = vmatprep.subr.mxu0 0.0
  %778 = vmatpush1.msra.mxu0 %v156
  %779 = vmatprep.subr.mxu0 0.0
  %780 = vmatpush1.msra.mxu0 %v155
  %781 = vmatprep.subr.mxu0 0.0
  %782 = vmatpush1.msra.mxu0 %v154
  %783 = vmatprep.subr.mxu0 0.0
  %784 = vmatpush1.msra.mxu0 %v153
  %785 = vmatprep.subr.mxu0 0.0
  %786 = vmatpush1.msra.mxu0 %v152
  %787 = vmatprep.subr.mxu0 0.0
  %788 = vmatpush1.msra.mxu0 %v151
  %789 = vmatprep.subr.mxu0 0.0
  %790 = vmatpush1.msra.mxu0 %v150
  %791 = vmatprep.subr.mxu0 0.0
  %792 = vmatpush1.msra.mxu0 %v149
  %793 = vmatprep.subr.mxu0 0.0
  %794 = vmatpush1.msra.mxu0 %v148
  %795 = vmatprep.subr.mxu0 0.0
  %796 = vmatpush1.msra.mxu0 %v147
  %797 = vmatprep.subr.mxu0 0.0
  %798 = vmatpush1.msra.mxu0 %v146
  %799 = vmatprep.subr.mxu0 0.0
  %800 = vmatpush1.msra.mxu0 %v145
  %801 = vmatprep.subr.mxu0 0.0
  %802 = vmatpush1.msra.mxu0 %v144
  %803 = vmatprep.subr.mxu0 0.0
  %804 = vmatpush1.msra.mxu0 %v143
  %805 = vmatprep.subr.mxu0 0.0
  %806 = vmatpush1.msra.mxu0 %v142
  %807 = vmatprep.subr.mxu0 0.0
  %808 = vmatpush2.msra.mxu0 %v173
  %809 = vmatprep.subr.mxu0 0.0
  %810 = vmatpush2.msra.mxu0 %v172
  %811 = vmatprep.subr.mxu0 0.0
  %812 = vmatpush2.msra.mxu0 %v171
  %813 = vmatprep.subr.mxu0 0.0
  %814 = vmatpush2.msra.mxu0 %v170
  %815 = vmatprep.subr.mxu0 0.0
  %816 = vmatpush2.msra.mxu0 %v169
  %817 = vmatprep.subr.mxu0 0.0
  %818 = vmatpush2.msra.mxu0 %v168
  %819 = vmatprep.subr.mxu0 0.0
  %820 = vmatpush2.msra.mxu0 %v167
  %821 = vmatprep.subr.mxu0 0.0
  %822 = vmatpush2.msra.mxu0 %v166
  %823 = vmatprep.subr.mxu0 0.0
  %824 = vmatpush2.msra.mxu0 %v165
  %825 = vmatprep.subr.mxu0 0.0
  %826 = vmatpush2.msra.mxu0 %v164
  %827 = vmatprep.subr.mxu0 0.0
  %828 = vmatpush2.msra.mxu0 %v163
  %829 = vmatprep.subr.mxu0 0.0
  %830 = vmatpush2.msra.mxu0 %v162
  %831 = vmatprep.subr.mxu0 0.0
  %832 = vmatpush2.msra.mxu0 %v161
  %833 = vmatprep.subr.mxu0 0.0
  %834 = vmatpush2.msra.mxu0 %v160
  %835 = vmatprep.subr.mxu0 0.0
  %836 = vmatpush2.msra.mxu0 %v159
  %837 = vmatprep.subr.mxu0 0.0
  %838 = vmatpush2.msra.mxu0 %v158
  %839 = vmatprep.mubr.f32.mxu0 %v21
  %840 = vmatmul.mubr.f32.gmra.mxu0 %v20
  %v841 = vpop.f32.mrf.mxu0
  %v842 = vadd.f32 %v772, %v841
  %v843 = vpop.f32.mrf.mxu0
  %844 = vdwg.mxu0
  %845 = vmatprep.subr.mxu0 0.0
  %846 = vmatpush1.msra.mxu0 %v189
  %847 = vmatprep.subr.mxu0 0.0
  %848 = vmatpush1.msra.mxu0 %v188
  %849 = vmatprep.subr.mxu0 0.0
  %850 = vmatpush1.msra.mxu0 %v187
  %851 = vmatprep.subr.mxu0 0.0
  %852 = vmatpush1.msra.mxu0 %v186
  %853 = vmatprep.subr.mxu0 0.0
  %854 = vmatpush1.msra.mxu0 %v185
  %855 = vmatprep.subr.mxu0 0.0
  %856 = vmatpush1.msra.mxu0 %v184
  %857 = vmatprep.subr.mxu0 0.0
  %858 = vmatpush1.msra.mxu0 %v183
  %859 = vmatprep.subr.mxu0 0.0
  %860 = vmatpush1.msra.mxu0 %v182
  %861 = vmatprep.subr.mxu0 0.0
  %862 = vmatpush1.msra.mxu0 %v181
  %863 = vmatprep.subr.mxu0 0.0
  %864 = vmatpush1.msra.mxu0 %v180
  %865 = vmatprep.subr.mxu0 0.0
  %866 = vmatpush1.msra.mxu0 %v179
  %867 = vmatprep.subr.mxu0 0.0
  %868 = vmatpush1.msra.mxu0 %v178
  %869 = vmatprep.subr.mxu0 0.0
  %870 = vmatpush1.msra.mxu0 %v177
  %871 = vmatprep.subr.mxu0 0.0
  %872 = vmatpush1.msra.mxu0 %v176
  %873 = vmatprep.subr.mxu0 0.0
  %874 = vmatpush1.msra.mxu0 %v175
  %875 = vmatprep.subr.mxu0 0.0
  %876 = vmatpush1.msra.mxu0 %v174
  %877 = vmatprep.subr.mxu0 0.0
  %878 = vmatpush2.msra.mxu0 %v205
  %879 = vmatprep.subr.mxu0 0.0
  %880 = vmatpush2.msra.mxu0 %v204
  %881 = vmatprep.subr.mxu0 0.0
  %882 = vmatpush2.msra.mxu0 %v203
  %883 = vmatprep.subr.mxu0 0.0
  %884 = vmatpush2.msra.mxu0 %v202
  %885 = vmatprep.subr.mxu0 0.0
  %886 = vmatpush2.msra.mxu0 %v201
  %887 = vmatprep.subr.mxu0 0.0
  %888 = vmatpush2.msra.mxu0 %v200
  %889 = vmatprep.subr.mxu0 0.0
  %890 = vmatpush2.msra.mxu0 %v199
  %891 = vmatprep.subr.mxu0 0.0
  %892 = vmatpush2.msra.mxu0 %v198
  %893 = vmatprep.subr.mxu0 0.0
  %894 = vmatpush2.msra.mxu0 %v197
  %895 = vmatprep.subr.mxu0 0.0
  %896 = vmatpush2.msra.mxu0 %v196
  %897 = vmatprep.subr.mxu0 0.0
  %898 = vmatpush2.msra.mxu0 %v195
  %899 = vmatprep.subr.mxu0 0.0
  %900 = vmatpush2.msra.mxu0 %v194
  %901 = vmatprep.subr.mxu0 0.0
  %902 = vmatpush2.msra.mxu0 %v193
  %903 = vmatprep.subr.mxu0 0.0
  %904 = vmatpush2.msra.mxu0 %v192
  %905 = vmatprep.subr.mxu0 0.0
  %906 = vmatpush2.msra.mxu0 %v191
  %907 = vmatprep.subr.mxu0 0.0
  %908 = vmatpush2.msra.mxu0 %v190
  %909 = vmatprep.mubr.f32.mxu0 %v23
  %910 = vmatmul.mubr.f32.gmra.mxu0 %v22
  %v911 = vpop.f32.mrf.mxu0
  %v912 = vadd.f32 %v842, %v911
  %v913 = vpop.f32.mrf.mxu0
  %914 = vdwg.mxu0
  %915 = vmatprep.subr.mxu0 0.0
  %916 = vmatpush1.msra.mxu0 %v221
  %917 = vmatprep.subr.mxu0 0.0
  %918 = vmatpush1.msra.mxu0 %v220
  %919 = vmatprep.subr.mxu0 0.0
  %920 = vmatpush1.msra.mxu0 %v219
  %921 = vmatprep.subr.mxu0 0.0
  %922 = vmatpush1.msra.mxu0 %v218
  %923 = vmatprep.subr.mxu0 0.0
  %924 = vmatpush1.msra.mxu0 %v217
  %925 = vmatprep.subr.mxu0 0.0
  %926 = vmatpush1.msra.mxu0 %v216
  %927 = vmatprep.subr.mxu0 0.0
  %928 = vmatpush1.msra.mxu0 %v215
  %929 = vmatprep.subr.mxu0 0.0
  %930 = vmatpush1.msra.mxu0 %v214
  %931 = vmatprep.subr.mxu0 0.0
  %932 = vmatpush1.msra.mxu0 %v213
  %933 = vmatprep.subr.mxu0 0.0
  %934 = vmatpush1.msra.mxu0 %v212
  %935 = vmatprep.subr.mxu0 0.0
  %936 = vmatpush1.msra.mxu0 %v211
  %937 = vmatprep.subr.mxu0 0.0
  %938 = vmatpush1.msra.mxu0 %v210
  %939 = vmatprep.subr.mxu0 0.0
  %940 = vmatpush1.msra.mxu0 %v209
  %941 = vmatprep.subr.mxu0 0.0
  %942 = vmatpush1.msra.mxu0 %v208
  %943 = vmatprep.subr.mxu0 0.0
  %944 = vmatpush1.msra.mxu0 %v207
  %945 = vmatprep.subr.mxu0 0.0
  %946 = vmatpush1.msra.mxu0 %v206
  %947 = vmatprep.subr.mxu0 0.0
  %948 = vmatpush2.msra.mxu0 %v237
  %949 = vmatprep.subr.mxu0 0.0
  %950 = vmatpush2.msra.mxu0 %v236
  %951 = vmatprep.subr.mxu0 0.0
  %952 = vmatpush2.msra.mxu0 %v235
  %953 = vmatprep.subr.mxu0 0.0
  %954 = vmatpush2.msra.mxu0 %v234
  %955 = vmatprep.subr.mxu0 0.0
  %956 = vmatpush2.msra.mxu0 %v233
  %957 = vmatprep.subr.mxu0 0.0
  %958 = vmatpush2.msra.mxu0 %v232
  %959 = vmatprep.subr.mxu0 0.0
  %960 = vmatpush2.msra.mxu0 %v231
  %961 = vmatprep.subr.mxu0 0.0
  %962 = vmatpush2.msra.mxu0 %v230
  %963 = vmatprep.subr.mxu0 0.0
  %964 = vmatpush2.msra.mxu0 %v229
  %965 = vmatprep.subr.mxu0 0.0
  %966 = vmatpush2.msra.mxu0 %v228
  %967 = vmatprep.subr.mxu0 0.0
  %968 = vmatpush2.msra.mxu0 %v227
  %969 = vmatprep.subr.mxu0 0.0
  %970 = vmatpush2.msra.mxu0 %v226
  %971 = vmatprep.subr.mxu0 0.0
  %972 = vmatpush2.msra.mxu0 %v225
  %973 = vmatprep.subr.mxu0 0.0
  %974 = vmatpush2.msra.mxu0 %v224
  %975 = vmatprep.subr.mxu0 0.0
  %976 = vmatpush2.msra.mxu0 %v223
  %977 = vmatprep.subr.mxu0 0.0
  %978 = vmatpush2.msra.mxu0 %v222
  %979 = vmatprep.mubr.f32.mxu0 %v25
  %980 = vmatmul.mubr.f32.gmra.mxu0 %v24
  %v981 = vpop.f32.mrf.mxu0
  %v982 = vadd.f32 %v912, %v981
  %v983 = vpop.f32.mrf.mxu0
  %984 = vdwg.mxu0
  %985 = vmatprep.subr.mxu0 0.0
  %986 = vmatpush1.msra.mxu0 %v253
  %987 = vmatprep.subr.mxu0 0.0
  %988 = vmatpush1.msra.mxu0 %v252
  %989 = vmatprep.subr.mxu0 0.0
  %990 = vmatpush1.msra.mxu0 %v251
  %991 = vmatprep.subr.mxu0 0.0
  %992 = vmatpush1.msra.mxu0 %v250
  %993 = vmatprep.subr.mxu0 0.0
  %994 = vmatpush1.msra.mxu0 %v249
  %995 = vmatprep.subr.mxu0 0.0
  %996 = vmatpush1.msra.mxu0 %v248
  %997 = vmatprep.subr.mxu0 0.0
  %998 = vmatpush1.msra.mxu0 %v247
  %999 = vmatprep.subr.mxu0 0.0
  %1000 = vmatpush1.msra.mxu0 %v246
  %1001 = vmatprep.subr.mxu0 0.0
  %1002 = vmatpush1.msra.mxu0 %v245
  %1003 = vmatprep.subr.mxu0 0.0
  %1004 = vmatpush1.msra.mxu0 %v244
  %1005 = vmatprep.subr.mxu0 0.0
  %1006 = vmatpush1.msra.mxu0 %v243
  %1007 = vmatprep.subr.mxu0 0.0
  %1008 = vmatpush1.msra.mxu0 %v242
  %1009 = vmatprep.subr.mxu0 0.0
  %1010 = vmatpush1.msra.mxu0 %v241
  %1011 = vmatprep.subr.mxu0 0.0
  %1012 = vmatpush1.msra.mxu0 %v240
  %1013 = vmatprep.subr.mxu0 0.0
  %1014 = vmatpush1.msra.mxu0 %v239
  %1015 = vmatprep.subr.mxu0 0.0
  %1016 = vmatpush1.msra.mxu0 %v238
  %1017 = vmatprep.subr.mxu0 0.0
  %1018 = vmatpush2.msra.mxu0 %v269
  %1019 = vmatprep.subr.mxu0 0.0
  %1020 = vmatpush2.msra.mxu0 %v268
  %1021 = vmatprep.subr.mxu0 0.0
  %1022 = vmatpush2.msra.mxu0 %v267
  %1023 = vmatprep.subr.mxu0 0.0
  %1024 = vmatpush2.msra.mxu0 %v266
  %1025 = vmatprep.subr.mxu0 0.0
  %1026 = vmatpush2.msra.mxu0 %v265
  %1027 = vmatprep.subr.mxu0 0.0
  %1028 = vmatpush2.msra.mxu0 %v264
  %1029 = vmatprep.subr.mxu0 0.0
  %1030 = vmatpush2.msra.mxu0 %v263
  %1031 = vmatprep.subr.mxu0 0.0
  %1032 = vmatpush2.msra.mxu0 %v262
  %1033 = vmatprep.subr.mxu0 0.0
  %1034 = vmatpush2.msra.mxu0 %v261
  %1035 = vmatprep.subr.mxu0 0.0
  %1036 = vmatpush2.msra.mxu0 %v260
  %1037 = vmatprep.subr.mxu0 0.0
  %1038 = vmatpush2.msra.mxu0 %v259
  %1039 = vmatprep.subr.mxu0 0.0
  %1040 = vmatpush2.msra.mxu0 %v258
  %1041 = vmatprep.subr.mxu0 0.0
  %1042 = vmatpush2.msra.mxu0 %v257
  %1043 = vmatprep.subr.mxu0 0.0
  %1044 = vmatpush2.msra.mxu0 %v256
  %1045 = vmatprep.subr.mxu0 0.0
  %1046 = vmatpush2.msra.mxu0 %v255
  %1047 = vmatprep.subr.mxu0 0.0
  %1048 = vmatpush2.msra.mxu0 %v254
  %1049 = vmatprep.mubr.f32.mxu0 %v27
  %1050 = vmatmul.mubr.f32.gmra.mxu0 %v26
  %v1051 = vpop.f32.mrf.mxu0
  %v1052 = vadd.f32 %v982, %v1051
  %v1053 = vpop.f32.mrf.mxu0
  %1054 = vdwg.mxu0
  %1055 = vmatprep.subr.mxu0 0.0
  %1056 = vmatpush1.msra.mxu0 %v285
  %1057 = vmatprep.subr.mxu0 0.0
  %1058 = vmatpush1.msra.mxu0 %v284
  %1059 = vmatprep.subr.mxu0 0.0
  %1060 = vmatpush1.msra.mxu0 %v283
  %1061 = vmatprep.subr.mxu0 0.0
  %1062 = vmatpush1.msra.mxu0 %v282
  %1063 = vmatprep.subr.mxu0 0.0
  %1064 = vmatpush1.msra.mxu0 %v281
  %1065 = vmatprep.subr.mxu0 0.0
  %1066 = vmatpush1.msra.mxu0 %v280
  %1067 = vmatprep.subr.mxu0 0.0
  %1068 = vmatpush1.msra.mxu0 %v279
  %1069 = vmatprep.subr.mxu0 0.0
  %1070 = vmatpush1.msra.mxu0 %v278
  %1071 = vmatprep.subr.mxu0 0.0
  %1072 = vmatpush1.msra.mxu0 %v277
  %1073 = vmatprep.subr.mxu0 0.0
  %1074 = vmatpush1.msra.mxu0 %v276
  %1075 = vmatprep.subr.mxu0 0.0
  %1076 = vmatpush1.msra.mxu0 %v275
  %1077 = vmatprep.subr.mxu0 0.0
  %1078 = vmatpush1.msra.mxu0 %v274
  %1079 = vmatprep.subr.mxu0 0.0
  %1080 = vmatpush1.msra.mxu0 %v273
  %1081 = vmatprep.subr.mxu0 0.0
  %1082 = vmatpush1.msra.mxu0 %v272
  %1083 = vmatprep.subr.mxu0 0.0
  %1084 = vmatpush1.msra.mxu0 %v271
  %1085 = vmatprep.subr.mxu0 0.0
  %1086 = vmatpush1.msra.mxu0 %v270
  %1087 = vmatprep.subr.mxu0 0.0
  %1088 = vmatpush2.msra.mxu0 %v301
  %1089 = vmatprep.subr.mxu0 0.0
  %1090 = vmatpush2.msra.mxu0 %v300
  %1091 = vmatprep.subr.mxu0 0.0
  %1092 = vmatpush2.msra.mxu0 %v299
  %1093 = vmatprep.subr.mxu0 0.0
  %1094 = vmatpush2.msra.mxu0 %v298
  %1095 = vmatprep.subr.mxu0 0.0
  %1096 = vmatpush2.msra.mxu0 %v297
  %1097 = vmatprep.subr.mxu0 0.0
  %1098 = vmatpush2.msra.mxu0 %v296
  %1099 = vmatprep.subr.mxu0 0.0
  %1100 = vmatpush2.msra.mxu0 %v295
  %1101 = vmatprep.subr.mxu0 0.0
  %1102 = vmatpush2.msra.mxu0 %v294
  %1103 = vmatprep.subr.mxu0 0.0
  %1104 = vmatpush2.msra.mxu0 %v293
  %1105 = vmatprep.subr.mxu0 0.0
  %1106 = vmatpush2.msra.mxu0 %v292
  %1107 = vmatprep.subr.mxu0 0.0
  %1108 = vmatpush2.msra.mxu0 %v291
  %1109 = vmatprep.subr.mxu0 0.0
  %1110 = vmatpush2.msra.mxu0 %v290
  %1111 = vmatprep.subr.mxu0 0.0
  %1112 = vmatpush2.msra.mxu0 %v289
  %1113 = vmatprep.subr.mxu0 0.0
  %1114 = vmatpush2.msra.mxu0 %v288
  %1115 = vmatprep.subr.mxu0 0.0
  %1116 = vmatpush2.msra.mxu0 %v287
  %1117 = vmatprep.subr.mxu0 0.0
  %1118 = vmatpush2.msra.mxu0 %v286
  %1119 = vmatprep.mubr.f32.mxu0 %v29
  %1120 = vmatmul.mubr.f32.gmra.mxu0 %v28
  %v1121 = vpop.f32.mrf.mxu0
  %v1122 = vadd.f32 %v1052, %v1121
  %v1123 = vpop.f32.mrf.mxu0
  %1124 = vdwg.mxu0
  %1125 = vmatprep.subr.mxu0 0.0
  %1126 = vmatpush1.msra.mxu0 %v317
  %1127 = vmatprep.subr.mxu0 0.0
  %1128 = vmatpush1.msra.mxu0 %v316
  %1129 = vmatprep.subr.mxu0 0.0
  %1130 = vmatpush1.msra.mxu0 %v315
  %1131 = vmatprep.subr.mxu0 0.0
  %1132 = vmatpush1.msra.mxu0 %v314
  %1133 = vmatprep.subr.mxu0 0.0
  %1134 = vmatpush1.msra.mxu0 %v313
  %1135 = vmatprep.subr.mxu0 0.0
  %1136 = vmatpush1.msra.mxu0 %v312
  %1137 = vmatprep.subr.mxu0 0.0
  %1138 = vmatpush1.msra.mxu0 %v311
  %1139 = vmatprep.subr.mxu0 0.0
  %1140 = vmatpush1.msra.mxu0 %v310
  %1141 = vmatprep.subr.mxu0 0.0
  %1142 = vmatpush1.msra.mxu0 %v309
  %1143 = vmatprep.subr.mxu0 0.0
  %1144 = vmatpush1.msra.mxu0 %v308
  %1145 = vmatprep.subr.mxu0 0.0
  %1146 = vmatpush1.msra.mxu0 %v307
  %1147 = vmatprep.subr.mxu0 0.0
  %1148 = vmatpush1.msra.mxu0 %v306
  %1149 = vmatprep.subr.mxu0 0.0
  %1150 = vmatpush1.msra.mxu0 %v305
  %1151 = vmatprep.subr.mxu0 0.0
  %1152 = vmatpush1.msra.mxu0 %v304
  %1153 = vmatprep.subr.mxu0 0.0
  %1154 = vmatpush1.msra.mxu0 %v303
  %1155 = vmatprep.subr.mxu0 0.0
  %1156 = vmatpush1.msra.mxu0 %v302
  %1157 = vmatprep.subr.mxu0 0.0
  %1158 = vmatpush2.msra.mxu0 %v333
  %1159 = vmatprep.subr.mxu0 0.0
  %1160 = vmatpush2.msra.mxu0 %v332
  %1161 = vmatprep.subr.mxu0 0.0
  %1162 = vmatpush2.msra.mxu0 %v331
  %1163 = vmatprep.subr.mxu0 0.0
  %1164 = vmatpush2.msra.mxu0 %v330
  %1165 = vmatprep.subr.mxu0 0.0
  %1166 = vmatpush2.msra.mxu0 %v329
  %1167 = vmatprep.subr.mxu0 0.0
  %1168 = vmatpush2.msra.mxu0 %v328
  %1169 = vmatprep.subr.mxu0 0.0
  %1170 = vmatpush2.msra.mxu0 %v327
  %1171 = vmatprep.subr.mxu0 0.0
  %1172 = vmatpush2.msra.mxu0 %v326
  %1173 = vmatprep.subr.mxu0 0.0
  %1174 = vmatpush2.msra.mxu0 %v325
  %1175 = vmatprep.subr.mxu0 0.0
  %1176 = vmatpush2.msra.mxu0 %v324
  %1177 = vmatprep.subr.mxu0 0.0
  %1178 = vmatpush2.msra.mxu0 %v323
  %1179 = vmatprep.subr.mxu0 0.0
  %1180 = vmatpush2.msra.mxu0 %v322
  %1181 = vmatprep.subr.mxu0 0.0
  %1182 = vmatpush2.msra.mxu0 %v321
  %1183 = vmatprep.subr.mxu0 0.0
  %1184 = vmatpush2.msra.mxu0 %v320
  %1185 = vmatprep.subr.mxu0 0.0
  %1186 = vmatpush2.msra.mxu0 %v319
  %1187 = vmatprep.subr.mxu0 0.0
  %1188 = vmatpush2.msra.mxu0 %v318
  %1189 = vmatprep.mubr.f32.mxu0 %v31
  %1190 = vmatmul.mubr.f32.gmra.mxu0 %v30
  %v1191 = vpop.f32.mrf.mxu0
  %v1192 = vadd.f32 %v1122, %v1191
  %v1193 = vpop.f32.mrf.mxu0
  %1194 = vdwg.mxu0
  %1195 = vmatprep.subr.mxu0 0.0
  %1196 = vmatpush1.msra.mxu0 %v349
  %1197 = vmatprep.subr.mxu0 0.0
  %1198 = vmatpush1.msra.mxu0 %v348
  %1199 = vmatprep.subr.mxu0 0.0
  %1200 = vmatpush1.msra.mxu0 %v347
  %1201 = vmatprep.subr.mxu0 0.0
  %1202 = vmatpush1.msra.mxu0 %v346
  %1203 = vmatprep.subr.mxu0 0.0
  %1204 = vmatpush1.msra.mxu0 %v345
  %1205 = vmatprep.subr.mxu0 0.0
  %1206 = vmatpush1.msra.mxu0 %v344
  %1207 = vmatprep.subr.mxu0 0.0
  %1208 = vmatpush1.msra.mxu0 %v343
  %1209 = vmatprep.subr.mxu0 0.0
  %1210 = vmatpush1.msra.mxu0 %v342
  %1211 = vmatprep.subr.mxu0 0.0
  %1212 = vmatpush1.msra.mxu0 %v341
  %1213 = vmatprep.subr.mxu0 0.0
  %1214 = vmatpush1.msra.mxu0 %v340
  %1215 = vmatprep.subr.mxu0 0.0
  %1216 = vmatpush1.msra.mxu0 %v339
  %1217 = vmatprep.subr.mxu0 0.0
  %1218 = vmatpush1.msra.mxu0 %v338
  %1219 = vmatprep.subr.mxu0 0.0
  %1220 = vmatpush1.msra.mxu0 %v337
  %1221 = vmatprep.subr.mxu0 0.0
  %1222 = vmatpush1.msra.mxu0 %v336
  %1223 = vmatprep.subr.mxu0 0.0
  %1224 = vmatpush1.msra.mxu0 %v335
  %1225 = vmatprep.subr.mxu0 0.0
  %1226 = vmatpush1.msra.mxu0 %v334
  %1227 = vmatprep.subr.mxu0 0.0
  %1228 = vmatpush2.msra.mxu0 %v365
  %1229 = vmatprep.subr.mxu0 0.0
  %1230 = vmatpush2.msra.mxu0 %v364
  %1231 = vmatprep.subr.mxu0 0.0
  %1232 = vmatpush2.msra.mxu0 %v363
  %1233 = vmatprep.subr.mxu0 0.0
  %1234 = vmatpush2.msra.mxu0 %v362
  %1235 = vmatprep.subr.mxu0 0.0
  %1236 = vmatpush2.msra.mxu0 %v361
  %1237 = vmatprep.subr.mxu0 0.0
  %1238 = vmatpush2.msra.mxu0 %v360
  %1239 = vmatprep.subr.mxu0 0.0
  %1240 = vmatpush2.msra.mxu0 %v359
  %1241 = vmatprep.subr.mxu0 0.0
  %1242 = vmatpush2.msra.mxu0 %v358
  %1243 = vmatprep.subr.mxu0 0.0
  %1244 = vmatpush2.msra.mxu0 %v357
  %1245 = vmatprep.subr.mxu0 0.0
  %1246 = vmatpush2.msra.mxu0 %v356
  %1247 = vmatprep.subr.mxu0 0.0
  %1248 = vmatpush2.msra.mxu0 %v355
  %1249 = vmatprep.subr.mxu0 0.0
  %1250 = vmatpush2.msra.mxu0 %v354
  %1251 = vmatprep.subr.mxu0 0.0
  %1252 = vmatpush2.msra.mxu0 %v353
  %1253 = vmatprep.subr.mxu0 0.0
  %1254 = vmatpush2.msra.mxu0 %v352
  %1255 = vmatprep.subr.mxu0 0.0
  %1256 = vmatpush2.msra.mxu0 %v351
  %1257 = vmatprep.subr.mxu0 0.0
  %1258 = vmatpush2.msra.mxu0 %v350
  %1259 = vmatprep.mubr.f32.mxu0 %v33
  %1260 = vmatmul.mubr.f32.gmra.mxu0 %v32
  %v1261 = vpop.f32.mrf.mxu0
  %v1262 = vadd.f32 %v1192, %v1261
  %v1263 = vpop.f32.mrf.mxu0
  %1264 = vdwg.mxu0
  %1265 = vmatprep.subr.mxu0 0.0
  %1266 = vmatpush1.msra.mxu0 %v381
  %1267 = vmatprep.subr.mxu0 0.0
  %1268 = vmatpush1.msra.mxu0 %v380
  %1269 = vmatprep.subr.mxu0 0.0
  %1270 = vmatpush1.msra.mxu0 %v379
  %1271 = vmatprep.subr.mxu0 0.0
  %1272 = vmatpush1.msra.mxu0 %v378
  %1273 = vmatprep.subr.mxu0 0.0
  %1274 = vmatpush1.msra.mxu0 %v377
  %1275 = vmatprep.subr.mxu0 0.0
  %1276 = vmatpush1.msra.mxu0 %v376
  %1277 = vmatprep.subr.mxu0 0.0
  %1278 = vmatpush1.msra.mxu0 %v375
  %1279 = vmatprep.subr.mxu0 0.0
  %1280 = vmatpush1.msra.mxu0 %v374
  %1281 = vmatprep.subr.mxu0 0.0
  %1282 = vmatpush1.msra.mxu0 %v373
  %1283 = vmatprep.subr.mxu0 0.0
  %1284 = vmatpush1.msra.mxu0 %v372
  %1285 = vmatprep.subr.mxu0 0.0
  %1286 = vmatpush1.msra.mxu0 %v371
  %1287 = vmatprep.subr.mxu0 0.0
  %1288 = vmatpush1.msra.mxu0 %v370
  %1289 = vmatprep.subr.mxu0 0.0
  %1290 = vmatpush1.msra.mxu0 %v369
  %1291 = vmatprep.subr.mxu0 0.0
  %1292 = vmatpush1.msra.mxu0 %v368
  %1293 = vmatprep.subr.mxu0 0.0
  %1294 = vmatpush1.msra.mxu0 %v367
  %1295 = vmatprep.subr.mxu0 0.0
  %1296 = vmatpush1.msra.mxu0 %v366
  %1297 = vmatprep.subr.mxu0 0.0
  %1298 = vmatpush2.msra.mxu0 %v397
  %1299 = vmatprep.subr.mxu0 0.0
  %1300 = vmatpush2.msra.mxu0 %v396
  %1301 = vmatprep.subr.mxu0 0.0
  %1302 = vmatpush2.msra.mxu0 %v395
  %1303 = vmatprep.subr.mxu0 0.0
  %1304 = vmatpush2.msra.mxu0 %v394
  %1305 = vmatprep.subr.mxu0 0.0
  %1306 = vmatpush2.msra.mxu0 %v393
  %1307 = vmatprep.subr.mxu0 0.0
  %1308 = vmatpush2.msra.mxu0 %v392
  %1309 = vmatprep.subr.mxu0 0.0
  %1310 = vmatpush2.msra.mxu0 %v391
  %1311 = vmatprep.subr.mxu0 0.0
  %1312 = vmatpush2.msra.mxu0 %v390
  %1313 = vmatprep.subr.mxu0 0.0
  %1314 = vmatpush2.msra.mxu0 %v389
  %1315 = vmatprep.subr.mxu0 0.0
  %1316 = vmatpush2.msra.mxu0 %v388
  %1317 = vmatprep.subr.mxu0 0.0
  %1318 = vmatpush2.msra.mxu0 %v387
  %1319 = vmatprep.subr.mxu0 0.0
  %1320 = vmatpush2.msra.mxu0 %v386
  %1321 = vmatprep.subr.mxu0 0.0
  %1322 = vmatpush2.msra.mxu0 %v385
  %1323 = vmatprep.subr.mxu0 0.0
  %1324 = vmatpush2.msra.mxu0 %v384
  %1325 = vmatprep.subr.mxu0 0.0
  %1326 = vmatpush2.msra.mxu0 %v383
  %1327 = vmatprep.subr.mxu0 0.0
  %1328 = vmatpush2.msra.mxu0 %v382
  %1329 = vmatprep.mubr.f32.mxu0 %v35
  %1330 = vmatmul.mubr.f32.gmra.mxu0 %v34
  %v1331 = vpop.f32.mrf.mxu0
  %v1332 = vadd.f32 %v1262, %v1331
  %v1333 = vpop.f32.mrf.mxu0
  %1334 = vdwg.mxu0
  %1335 = vmatprep.subr.mxu0 0.0
  %1336 = vmatpush1.msra.mxu0 %v413
  %1337 = vmatprep.subr.mxu0 0.0
  %1338 = vmatpush1.msra.mxu0 %v412
  %1339 = vmatprep.subr.mxu0 0.0
  %1340 = vmatpush1.msra.mxu0 %v411
  %1341 = vmatprep.subr.mxu0 0.0
  %1342 = vmatpush1.msra.mxu0 %v410
  %1343 = vmatprep.subr.mxu0 0.0
  %1344 = vmatpush1.msra.mxu0 %v409
  %1345 = vmatprep.subr.mxu0 0.0
  %1346 = vmatpush1.msra.mxu0 %v408
  %1347 = vmatprep.subr.mxu0 0.0
  %1348 = vmatpush1.msra.mxu0 %v407
  %1349 = vmatprep.subr.mxu0 0.0
  %1350 = vmatpush1.msra.mxu0 %v406
  %1351 = vmatprep.subr.mxu0 0.0
  %1352 = vmatpush1.msra.mxu0 %v405
  %1353 = vmatprep.subr.mxu0 0.0
  %1354 = vmatpush1.msra.mxu0 %v404
  %1355 = vmatprep.subr.mxu0 0.0
  %1356 = vmatpush1.msra.mxu0 %v403
  %1357 = vmatprep.subr.mxu0 0.0
  %1358 = vmatpush1.msra.mxu0 %v402
  %1359 = vmatprep.subr.mxu0 0.0
  %1360 = vmatpush1.msra.mxu0 %v401
  %1361 = vmatprep.subr.mxu0 0.0
  %1362 = vmatpush1.msra.mxu0 %v400
  %1363 = vmatprep.subr.mxu0 0.0
  %1364 = vmatpush1.msra.mxu0 %v399
  %1365 = vmatprep.subr.mxu0 0.0
  %1366 = vmatpush1.msra.mxu0 %v398
  %1367 = vmatprep.subr.mxu0 0.0
  %1368 = vmatpush2.msra.mxu0 %v429
  %1369 = vmatprep.subr.mxu0 0.0
  %1370 = vmatpush2.msra.mxu0 %v428
  %1371 = vmatprep.subr.mxu0 0.0
  %1372 = vmatpush2.msra.mxu0 %v427
  %1373 = vmatprep.subr.mxu0 0.0
  %1374 = vmatpush2.msra.mxu0 %v426
  %1375 = vmatprep.subr.mxu0 0.0
  %1376 = vmatpush2.msra.mxu0 %v425
  %1377 = vmatprep.subr.mxu0 0.0
  %1378 = vmatpush2.msra.mxu0 %v424
  %1379 = vmatprep.subr.mxu0 0.0
  %1380 = vmatpush2.msra.mxu0 %v423
  %1381 = vmatprep.subr.mxu0 0.0
  %1382 = vmatpush2.msra.mxu0 %v422
  %1383 = vmatprep.subr.mxu0 0.0
  %1384 = vmatpush2.msra.mxu0 %v421
  %1385 = vmatprep.subr.mxu0 0.0
  %1386 = vmatpush2.msra.mxu0 %v420
  %1387 = vmatprep.subr.mxu0 0.0
  %1388 = vmatpush2.msra.mxu0 %v419
  %1389 = vmatprep.subr.mxu0 0.0
  %1390 = vmatpush2.msra.mxu0 %v418
  %1391 = vmatprep.subr.mxu0 0.0
  %1392 = vmatpush2.msra.mxu0 %v417
  %1393 = vmatprep.subr.mxu0 0.0
  %1394 = vmatpush2.msra.mxu0 %v416
  %1395 = vmatprep.subr.mxu0 0.0
  %1396 = vmatpush2.msra.mxu0 %v415
  %1397 = vmatprep.subr.mxu0 0.0
  %1398 = vmatpush2.msra.mxu0 %v414
  %1399 = vmatprep.mubr.f32.mxu0 %v37
  %1400 = vmatmul.mubr.f32.gmra.mxu0 %v36
  %v1401 = vpop.f32.mrf.mxu0
  %v1402 = vadd.f32 %v1332, %v1401
  %v1403 = vpop.f32.mrf.mxu0
  %1404 = vdwg.mxu0
  %1405 = vmatprep.subr.mxu0 0.0
  %1406 = vmatpush1.msra.mxu0 %v445
  %1407 = vmatprep.subr.mxu0 0.0
  %1408 = vmatpush1.msra.mxu0 %v444
  %1409 = vmatprep.subr.mxu0 0.0
  %1410 = vmatpush1.msra.mxu0 %v443
  %1411 = vmatprep.subr.mxu0 0.0
  %1412 = vmatpush1.msra.mxu0 %v442
  %1413 = vmatprep.subr.mxu0 0.0
  %1414 = vmatpush1.msra.mxu0 %v441
  %1415 = vmatprep.subr.mxu0 0.0
  %1416 = vmatpush1.msra.mxu0 %v440
  %1417 = vmatprep.subr.mxu0 0.0
  %1418 = vmatpush1.msra.mxu0 %v439
  %1419 = vmatprep.subr.mxu0 0.0
  %1420 = vmatpush1.msra.mxu0 %v438
  %1421 = vmatprep.subr.mxu0 0.0
  %1422 = vmatpush1.msra.mxu0 %v437
  %1423 = vmatprep.subr.mxu0 0.0
  %1424 = vmatpush1.msra.mxu0 %v436
  %1425 = vmatprep.subr.mxu0 0.0
  %1426 = vmatpush1.msra.mxu0 %v435
  %1427 = vmatprep.subr.mxu0 0.0
  %1428 = vmatpush1.msra.mxu0 %v434
  %1429 = vmatprep.subr.mxu0 0.0
  %1430 = vmatpush1.msra.mxu0 %v433
  %1431 = vmatprep.subr.mxu0 0.0
  %1432 = vmatpush1.msra.mxu0 %v432
  %1433 = vmatprep.subr.mxu0 0.0
  %1434 = vmatpush1.msra.mxu0 %v431
  %1435 = vmatprep.subr.mxu0 0.0
  %1436 = vmatpush1.msra.mxu0 %v430
  %1437 = vmatprep.subr.mxu0 0.0
  %1438 = vmatpush2.msra.mxu0 %v461
  %1439 = vmatprep.subr.mxu0 0.0
  %1440 = vmatpush2.msra.mxu0 %v460
  %1441 = vmatprep.subr.mxu0 0.0
  %1442 = vmatpush2.msra.mxu0 %v459
  %1443 = vmatprep.subr.mxu0 0.0
  %1444 = vmatpush2.msra.mxu0 %v458
  %1445 = vmatprep.subr.mxu0 0.0
  %1446 = vmatpush2.msra.mxu0 %v457
  %1447 = vmatprep.subr.mxu0 0.0
  %1448 = vmatpush2.msra.mxu0 %v456
  %1449 = vmatprep.subr.mxu0 0.0
  %1450 = vmatpush2.msra.mxu0 %v455
  %1451 = vmatprep.subr.mxu0 0.0
  %1452 = vmatpush2.msra.mxu0 %v454
  %1453 = vmatprep.subr.mxu0 0.0
  %1454 = vmatpush2.msra.mxu0 %v453
  %1455 = vmatprep.subr.mxu0 0.0
  %1456 = vmatpush2.msra.mxu0 %v452
  %1457 = vmatprep.subr.mxu0 0.0
  %1458 = vmatpush2.msra.mxu0 %v451
  %1459 = vmatprep.subr.mxu0 0.0
  %1460 = vmatpush2.msra.mxu0 %v450
  %1461 = vmatprep.subr.mxu0 0.0
  %1462 = vmatpush2.msra.mxu0 %v449
  %1463 = vmatprep.subr.mxu0 0.0
  %1464 = vmatpush2.msra.mxu0 %v448
  %1465 = vmatprep.subr.mxu0 0.0
  %1466 = vmatpush2.msra.mxu0 %v447
  %1467 = vmatprep.subr.mxu0 0.0
  %1468 = vmatpush2.msra.mxu0 %v446
  %1469 = vmatprep.mubr.f32.mxu0 %v39
  %1470 = vmatmul.mubr.f32.gmra.mxu0 %v38
  %v1471 = vpop.f32.mrf.mxu0
  %v1472 = vadd.f32 %v1402, %v1471
  %v1473 = vpop.f32.mrf.mxu0
  %1474 = vdwg.mxu0
  %1475 = vmatprep.subr.mxu0 0.0
  %1476 = vmatpush1.msra.mxu0 %v477
  %1477 = vmatprep.subr.mxu0 0.0
  %1478 = vmatpush1.msra.mxu0 %v476
  %1479 = vmatprep.subr.mxu0 0.0
  %1480 = vmatpush1.msra.mxu0 %v475
  %1481 = vmatprep.subr.mxu0 0.0
  %1482 = vmatpush1.msra.mxu0 %v474
  %1483 = vmatprep.subr.mxu0 0.0
  %1484 = vmatpush1.msra.mxu0 %v473
  %1485 = vmatprep.subr.mxu0 0.0
  %1486 = vmatpush1.msra.mxu0 %v472
  %1487 = vmatprep.subr.mxu0 0.0
  %1488 = vmatpush1.msra.mxu0 %v471
  %1489 = vmatprep.subr.mxu0 0.0
  %1490 = vmatpush1.msra.mxu0 %v470
  %1491 = vmatprep.subr.mxu0 0.0
  %1492 = vmatpush1.msra.mxu0 %v469
  %1493 = vmatprep.subr.mxu0 0.0
  %1494 = vmatpush1.msra.mxu0 %v468
  %1495 = vmatprep.subr.mxu0 0.0
  %1496 = vmatpush1.msra.mxu0 %v467
  %1497 = vmatprep.subr.mxu0 0.0
  %1498 = vmatpush1.msra.mxu0 %v466
  %1499 = vmatprep.subr.mxu0 0.0
  %1500 = vmatpush1.msra.mxu0 %v465
  %1501 = vmatprep.subr.mxu0 0.0
  %1502 = vmatpush1.msra.mxu0 %v464
  %1503 = vmatprep.subr.mxu0 0.0
  %1504 = vmatpush1.msra.mxu0 %v463
  %1505 = vmatprep.subr.mxu0 0.0
  %1506 = vmatpush1.msra.mxu0 %v462
  %1507 = vmatprep.subr.mxu0 0.0
  %1508 = vmatpush2.msra.mxu0 %v493
  %1509 = vmatprep.subr.mxu0 0.0
  %1510 = vmatpush2.msra.mxu0 %v492
  %1511 = vmatprep.subr.mxu0 0.0
  %1512 = vmatpush2.msra.mxu0 %v491
  %1513 = vmatprep.subr.mxu0 0.0
  %1514 = vmatpush2.msra.mxu0 %v490
  %1515 = vmatprep.subr.mxu0 0.0
  %1516 = vmatpush2.msra.mxu0 %v489
  %1517 = vmatprep.subr.mxu0 0.0
  %1518 = vmatpush2.msra.mxu0 %v488
  %1519 = vmatprep.subr.mxu0 0.0
  %1520 = vmatpush2.msra.mxu0 %v487
  %1521 = vmatprep.subr.mxu0 0.0
  %1522 = vmatpush2.msra.mxu0 %v486
  %1523 = vmatprep.subr.mxu0 0.0
  %1524 = vmatpush2.msra.mxu0 %v485
  %1525 = vmatprep.subr.mxu0 0.0
  %1526 = vmatpush2.msra.mxu0 %v484
  %1527 = vmatprep.subr.mxu0 0.0
  %1528 = vmatpush2.msra.mxu0 %v483
  %1529 = vmatprep.subr.mxu0 0.0
  %1530 = vmatpush2.msra.mxu0 %v482
  %1531 = vmatprep.subr.mxu0 0.0
  %1532 = vmatpush2.msra.mxu0 %v481
  %1533 = vmatprep.subr.mxu0 0.0
  %1534 = vmatpush2.msra.mxu0 %v480
  %1535 = vmatprep.subr.mxu0 0.0
  %1536 = vmatpush2.msra.mxu0 %v479
  %1537 = vmatprep.subr.mxu0 0.0
  %1538 = vmatpush2.msra.mxu0 %v478
  %1539 = vmatprep.mubr.f32.mxu0 %v41
  %1540 = vmatmul.mubr.f32.gmra.mxu0 %v40
  %v1541 = vpop.f32.mrf.mxu0
  %v1542 = vadd.f32 %v1472, %v1541
  %v1543 = vpop.f32.mrf.mxu0
  %1544 = vdwg.mxu0
  %1545 = vmatprep.subr.mxu0 0.0
  %1546 = vmatpush1.msra.mxu0 %v509
  %1547 = vmatprep.subr.mxu0 0.0
  %1548 = vmatpush1.msra.mxu0 %v508
  %1549 = vmatprep.subr.mxu0 0.0
  %1550 = vmatpush1.msra.mxu0 %v507
  %1551 = vmatprep.subr.mxu0 0.0
  %1552 = vmatpush1.msra.mxu0 %v506
  %1553 = vmatprep.subr.mxu0 0.0
  %1554 = vmatpush1.msra.mxu0 %v505
  %1555 = vmatprep.subr.mxu0 0.0
  %1556 = vmatpush1.msra.mxu0 %v504
  %1557 = vmatprep.subr.mxu0 0.0
  %1558 = vmatpush1.msra.mxu0 %v503
  %1559 = vmatprep.subr.mxu0 0.0
  %1560 = vmatpush1.msra.mxu0 %v502
  %1561 = vmatprep.subr.mxu0 0.0
  %1562 = vmatpush1.msra.mxu0 %v501
  %1563 = vmatprep.subr.mxu0 0.0
  %1564 = vmatpush1.msra.mxu0 %v500
  %1565 = vmatprep.subr.mxu0 0.0
  %1566 = vmatpush1.msra.mxu0 %v499
  %1567 = vmatprep.subr.mxu0 0.0
  %1568 = vmatpush1.msra.mxu0 %v498
  %1569 = vmatprep.subr.mxu0 0.0
  %1570 = vmatpush1.msra.mxu0 %v497
  %1571 = vmatprep.subr.mxu0 0.0
  %1572 = vmatpush1.msra.mxu0 %v496
  %1573 = vmatprep.subr.mxu0 0.0
  %1574 = vmatpush1.msra.mxu0 %v495
  %1575 = vmatprep.subr.mxu0 0.0
  %1576 = vmatpush1.msra.mxu0 %v494
  %1577 = vmatprep.subr.mxu0 0.0
  %1578 = vmatpush2.msra.mxu0 %v525
  %1579 = vmatprep.subr.mxu0 0.0
  %1580 = vmatpush2.msra.mxu0 %v524
  %1581 = vmatprep.subr.mxu0 0.0
  %1582 = vmatpush2.msra.mxu0 %v523
  %1583 = vmatprep.subr.mxu0 0.0
  %1584 = vmatpush2.msra.mxu0 %v522
  %1585 = vmatprep.subr.mxu0 0.0
  %1586 = vmatpush2.msra.mxu0 %v521
  %1587 = vmatprep.subr.mxu0 0.0
  %1588 = vmatpush2.msra.mxu0 %v520
  %1589 = vmatprep.subr.mxu0 0.0
  %1590 = vmatpush2.msra.mxu0 %v519
  %1591 = vmatprep.subr.mxu0 0.0
  %1592 = vmatpush2.msra.mxu0 %v518
  %1593 = vmatprep.subr.mxu0 0.0
  %1594 = vmatpush2.msra.mxu0 %v517
  %1595 = vmatprep.subr.mxu0 0.0
  %1596 = vmatpush2.msra.mxu0 %v516
  %1597 = vmatprep.subr.mxu0 0.0
  %1598 = vmatpush2.msra.mxu0 %v515
  %1599 = vmatprep.subr.mxu0 0.0
  %1600 = vmatpush2.msra.mxu0 %v514
  %1601 = vmatprep.subr.mxu0 0.0
  %1602 = vmatpush2.msra.mxu0 %v513
  %1603 = vmatprep.subr.mxu0 0.0
  %1604 = vmatpush2.msra.mxu0 %v512
  %1605 = vmatprep.subr.mxu0 0.0
  %1606 = vmatpush2.msra.mxu0 %v511
  %1607 = vmatprep.subr.mxu0 0.0
  %1608 = vmatpush2.msra.mxu0 %v510
  %1609 = vmatprep.mubr.f32.mxu0 %v43
  %1610 = vmatmul.mubr.f32.gmra.mxu0 %v42
  %v1611 = vpop.f32.mrf.mxu0
  %v1612 = vadd.f32 %v1542, %v1611
  %v1613 = vpop.f32.mrf.mxu0
  %1614 = vdwg.mxu0
  %1615 = vmatprep.subr.mxu0 0.0
  %1616 = vmatpush1.msra.mxu0 %v541
  %1617 = vmatprep.subr.mxu0 0.0
  %1618 = vmatpush1.msra.mxu0 %v540
  %1619 = vmatprep.subr.mxu0 0.0
  %1620 = vmatpush1.msra.mxu0 %v539
  %1621 = vmatprep.subr.mxu0 0.0
  %1622 = vmatpush1.msra.mxu0 %v538
  %1623 = vmatprep.subr.mxu0 0.0
  %1624 = vmatpush1.msra.mxu0 %v537
  %1625 = vmatprep.subr.mxu0 0.0
  %1626 = vmatpush1.msra.mxu0 %v536
  %1627 = vmatprep.subr.mxu0 0.0
  %1628 = vmatpush1.msra.mxu0 %v535
  %1629 = vmatprep.subr.mxu0 0.0
  %1630 = vmatpush1.msra.mxu0 %v534
  %1631 = vmatprep.subr.mxu0 0.0
  %1632 = vmatpush1.msra.mxu0 %v533
  %1633 = vmatprep.subr.mxu0 0.0
  %1634 = vmatpush1.msra.mxu0 %v532
  %1635 = vmatprep.subr.mxu0 0.0
  %1636 = vmatpush1.msra.mxu0 %v531
  %1637 = vmatprep.subr.mxu0 0.0
  %1638 = vmatpush1.msra.mxu0 %v530
  %1639 = vmatprep.subr.mxu0 0.0
  %1640 = vmatpush1.msra.mxu0 %v529
  %1641 = vmatprep.subr.mxu0 0.0
  %1642 = vmatpush1.msra.mxu0 %v528
  %1643 = vmatprep.subr.mxu0 0.0
  %1644 = vmatpush1.msra.mxu0 %v527
  %1645 = vmatprep.subr.mxu0 0.0
  %1646 = vmatpush1.msra.mxu0 %v526
  %1647 = vmatprep.subr.mxu0 0.0
  %1648 = vmatpush2.msra.mxu0 %v557
  %1649 = vmatprep.subr.mxu0 0.0
  %1650 = vmatpush2.msra.mxu0 %v556
  %1651 = vmatprep.subr.mxu0 0.0
  %1652 = vmatpush2.msra.mxu0 %v555
  %1653 = vmatprep.subr.mxu0 0.0
  %1654 = vmatpush2.msra.mxu0 %v554
  %1655 = vmatprep.subr.mxu0 0.0
  %1656 = vmatpush2.msra.mxu0 %v553
  %1657 = vmatprep.subr.mxu0 0.0
  %1658 = vmatpush2.msra.mxu0 %v552
  %1659 = vmatprep.subr.mxu0 0.0
  %1660 = vmatpush2.msra.mxu0 %v551
  %1661 = vmatprep.subr.mxu0 0.0
  %1662 = vmatpush2.msra.mxu0 %v550
  %1663 = vmatprep.subr.mxu0 0.0
  %1664 = vmatpush2.msra.mxu0 %v549
  %1665 = vmatprep.subr.mxu0 0.0
  %1666 = vmatpush2.msra.mxu0 %v548
  %1667 = vmatprep.subr.mxu0 0.0
  %1668 = vmatpush2.msra.mxu0 %v547
  %1669 = vmatprep.subr.mxu0 0.0
  %1670 = vmatpush2.msra.mxu0 %v546
  %1671 = vmatprep.subr.mxu0 0.0
  %1672 = vmatpush2.msra.mxu0 %v545
  %1673 = vmatprep.subr.mxu0 0.0
  %1674 = vmatpush2.msra.mxu0 %v544
  %1675 = vmatprep.subr.mxu0 0.0
  %1676 = vmatpush2.msra.mxu0 %v543
  %1677 = vmatprep.subr.mxu0 0.0
  %1678 = vmatpush2.msra.mxu0 %v542
  %1679 = vmatprep.mubr.f32.mxu0 %v45
  %1680 = vmatmul.mubr.f32.gmra.mxu0 %v44
  %v1681 = vpop.f32.mrf.mxu0
  %v1682 = vadd.f32 %v1612, %v1681
  %v1683 = vpop.f32.mrf.mxu0
  %1684 = vdwg.mxu0
  %vm1685 = vcmask 31744
  %1686 = vst.msk [vmem:[%s3] sm:$0xff] %vm1685, %v1682
  // Predicated region
  $region14: #{tpu_custom_call.1} parent=0 // pred_check
    _
  $region15: #{tpu_custom_call.1} parent=0 // pred_check_branch
    %1688 = sbr.rel (0) target = $region17
  $region16: #{tpu_custom_call.1} parent=0 // pred_region
    _
  $region17: #{tpu_custom_call.1} parent=0 // pred_fallthru
    _
  // Predicated region
  $region18: #{tpu_custom_call.1} parent=0 // pred_check
    _
  $region19: #{tpu_custom_call.1} parent=0 // pred_check_branch
    %1690 = sbr.rel (0) target = $region21
  $region20: #{tpu_custom_call.1} parent=0 // pred_region
    _
  $region21: #{tpu_custom_call.1} parent=0 // pred_fallthru
    _

</llo_original>
